<compile_context>
chip_gen: v7x
topology: tpu7x:2x2x1
jax: 0.10.0
libtpu: 0.0.40
codegen_flags: <defaults>
</compile_context>

<pallas_src>
import jax
import jax.numpy as jnp
from jax.experimental import pallas as pl
from jax.experimental.pallas import tpu as pltpu

_PAD_OUT = 128  # final Linear(…,1) padded to 128 lanes for unmasked stores


# ----------------------------------------------------------------------------
# Kernel bodies
# ----------------------------------------------------------------------------
def _head(com, pro, w1_ref, b1_ref, w2_ref, b2_ref, w3_ref, b3_ref):
    """relu(relu([com|pro]@W1+b1) @ W2 + b2) @ W3p + b3p  (dropout = identity).

    com/pro are bf16 values; weights are bf16 refs; bias refs are f32.
    Matmuls accumulate in f32 (preferred_element_type); epilogue stays f32.
    """
    # torch.cat([com, pro], 1) @ W1  ==  com @ W1[:128] + pro @ W1[128:]
    h1 = (
        jnp.dot(com, w1_ref[:128, :], preferred_element_type=jnp.float32)
        + jnp.dot(pro, w1_ref[128:, :], preferred_element_type=jnp.float32)
        + b1_ref[...]
    )
    h1 = jnp.maximum(h1, 0.0).astype(jnp.bfloat16)  # ReLU (+Dropout=id)
    h2 = jnp.dot(h1, w2_ref[...], preferred_element_type=jnp.float32) + b2_ref[...]
    h2 = jnp.maximum(h2, 0.0).astype(jnp.bfloat16)  # ReLU (+Dropout=id)
    # Final layer padded to 128 output lanes; column 0 holds the affinity.
    return jnp.dot(h2, w3_ref[...], preferred_element_type=jnp.float32) + b3_ref[...]


def _single_head_kernel(com_ref, pro_ref, w1, b1, w2, b2, w3, b3, o_ref):
    o_ref[...] = _head(com_ref[...], pro_ref[...], w1, b1, w2, b2, w3, b3)


def _dual_head_kernel(
    com_ref, pro_ref,
    aw1, ab1, aw2, ab2, aw3, ab3,   # GCN head
    bw1, bb1, bw2, bb2, bw3, bb3,   # GIN head
    o_a_ref, o_b_ref,
):
    com = com_ref[...]
    pro = pro_ref[...]
    o_a_ref[...] = _head(com, pro, aw1, ab1, aw2, ab2, aw3, ab3)
    o_b_ref[...] = _head(com, pro, bw1, bb1, bw2, bb2, bw3, bb3)


# ----------------------------------------------------------------------------
# pallas_call wrapper
# ----------------------------------------------------------------------------
def _pick_batch_tile(batch):
    # 256-row tiles saturate the v6e/v7x MXU; 128 matches v5e; fall back to
    # small sublane-aligned tiles for tiny batches.
    for tb in (256, 128, 64, 32, 16, 8):
        if batch >= tb:
            return tb
    return 8


def _run_heads(com, pro, heads):
    """heads: list of (w1, b1, w2, b2, w3_pad, b3_pad); 1 or 2 heads."""
    batch = com.shape[0]
    tb = _pick_batch_tile(batch)
    bp = -(-batch // tb) * tb  # pad batch up to a tile multiple
    if bp != batch:
        com = jnp.pad(com, ((0, bp - batch), (0, 0)))
        pro = jnp.pad(pro, ((0, bp - batch), (0, 0)))
    com = com.astype(jnp.bfloat16)
    pro = pro.astype(jnp.bfloat16)

    act_spec = pl.BlockSpec((tb, 128), lambda i: (i, 0))
    out_spec = pl.BlockSpec((tb, _PAD_OUT), lambda i: (i, 0))
    const_spec = lambda a: pl.BlockSpec(a.shape, lambda i: (0, 0))  # resident

    flat_w, in_specs = [], [act_spec, act_spec]
    for hp in heads:
        for a in hp:
            flat_w.append(a)
            in_specs.append(const_spec(a))

    n_heads = len(heads)
    kernel = _single_head_kernel if n_heads == 1 else _dual_head_kernel
    out_shape = tuple(
        jax.ShapeDtypeStruct((bp, _PAD_OUT), jnp.float32) for _ in range(n_heads)
    )
    out_specs = tuple(out_spec for _ in range(n_heads))
    if n_heads == 1:
        out_shape, out_specs = out_shape[0], out_specs[0]

    # Cost hint for XLA's scheduler around the custom call.
    flops = 0
    bytes_accessed = 2 * (com.size * 2)  # com + pro (bf16)
    for (w1, _b1, w2, _b2, w3, _b3) in heads:
        flops += 2 * bp * (
            w1.shape[0] * w1.shape[1]
            + w2.shape[0] * w2.shape[1]
            + w3.shape[0] * w3.shape[1]
        )
        bytes_accessed += bp * _PAD_OUT * 4  # output
    bytes_accessed += sum(int(a.size * a.dtype.itemsize) for a in flat_w)

    out = pl.pallas_call(
        kernel,
        out_shape=out_shape,
        grid_spec=pltpu.PrefetchScalarGridSpec(
            num_scalar_prefetch=0,
            grid=(bp // tb,),
            in_specs=in_specs,
            out_specs=out_specs,
        ),
        compiler_params=pltpu.CompilerParams(
            dimension_semantics=("parallel",),      # shard batch over TCs (v7x)
            vmem_limit_bytes=32 * 1024 * 1024,      # weights ~3 MiB + tiles << 32 MiB
        ),
        cost_estimate=pl.CostEstimate(
            flops=int(flops), transcendentals=0, bytes_accessed=int(bytes_accessed)
        ),
    )(com, pro, *flat_w)

    if n_heads == 1:
        return out[:batch, :1]
    return tuple(o[:batch, :1] for o in out)


# ----------------------------------------------------------------------------
# Parameter construction (PyTorch Linear shapes transposed to [in, out];
# final layers zero-padded to 128 output lanes).
# ----------------------------------------------------------------------------
def _linear_params(key, fan_in, fan_out, pad_out=None):
    kw, kb = jax.random.split(key)
    bound = 1.0 / jnp.sqrt(jnp.float32(fan_in))
    w = jax.random.uniform(kw, (fan_in, fan_out), jnp.float32, -bound, bound)
    b = jax.random.uniform(kb, (1, fan_out), jnp.float32, -bound, bound)
    if pad_out is not None and pad_out > fan_out:
        w = jnp.pad(w, ((0, 0), (0, pad_out - fan_out)))
        b = jnp.pad(b, ((0, 0), (0, pad_out - fan_out)))
    # Weights feed the MXU in bf16 (half DMA, native MXU path); biases stay f32.
    return w.astype(jnp.bfloat16), b


def init_binding_affinity_params(key):
    keys = jax.random.split(key, 6)
    p = {}
    p["gcn_w1"], p["gcn_b1"] = _linear_params(keys[0], 256, 1024)
    p["gcn_w2"], p["gcn_b2"] = _linear_params(keys[1], 1024, 512)
    p["gcn_w3"], p["gcn_b3"] = _linear_params(keys[2], 512, 1, pad_out=_PAD_OUT)
    p["gin_w1"], p["gin_b1"] = _linear_params(keys[3], 256, 1024)
    p["gin_w2"], p["gin_b2"] = _linear_params(keys[4], 1024, 256)
    p["gin_w3"], p["gin_b3"] = _linear_params(keys[5], 256, 1, pad_out=_PAD_OUT)
    return p


def _head_tuple(params, pfx):
    return (
        params[f"{pfx}_w1"], params[f"{pfx}_b1"],
        params[f"{pfx}_w2"], params[f"{pfx}_b2"],
        params[f"{pfx}_w3"], params[f"{pfx}_b3"],
    )


def binding_affinity_forward(params, com, pro, model="GCN"):
    """Matches BindingAffinityLayer.forward (eval mode)."""
    if model == "GCN":
        return _run_heads(com, pro, [_head_tuple(params, "gcn")])
    elif model == "GIN":
        return _run_heads(com, pro, [_head_tuple(params, "gin")])
    else:
        print("Not Implemented")
        return None


def binding_affinity_forward_both(params, com, pro):
    """Fused variant: both GCN and GIN affinities from a single pallas_call."""
    return _run_heads(com, pro, [_head_tuple(params, "gcn"), _head_tuple(params, "gin")])


# ----------------------------------------------------------------------------
# Pure-JAX reference (mirrors the kernel's bf16-input / f32-accumulate math)
# ----------------------------------------------------------------------------
def _reference_forward(params, com, pro, model="GCN"):
    pfx = "gcn" if model == "GCN" else "gin"
    f32 = lambda a: a.astype(jnp.float32)
    bf = lambda a: a.astype(jnp.bfloat16).astype(jnp.float32)
    x = bf(jnp.concatenate([com, pro], axis=1))
    h1 = jnp.maximum(x @ f32(params[f"{pfx}_w1"]) + params[f"{pfx}_b1"], 0.0)
    h2 = jnp.maximum(bf(h1) @ f32(params[f"{pfx}_w2"]) + params[f"{pfx}_b2"], 0.0)
    out = bf(h2) @ f32(params[f"{pfx}_w3"]) + params[f"{pfx}_b3"]
    return out[:, :1]


if __name__ == "__main__":
    key = jax.random.PRNGKey(0)
    k_params, k_com, k_pro = jax.random.split(key, 3)

    params = init_binding_affinity_params(k_params)

    B = 8  # small sublane-aligned batch
    com = jax.random.normal(k_com, (B, 128), jnp.float32)
    pro = jax.random.normal(k_pro, (B, 128), jnp.float32)

    out_gcn = jax.block_until_ready(binding_affinity_forward(params, com, pro, "GCN"))
    out_gin = jax.block_until_ready(binding_affinity_forward(params, com, pro, "GIN"))
    both_gcn, both_gin = jax.block_until_ready(
        binding_affinity_forward_both(params, com, pro)
    )

    ref_gcn = _reference_forward(params, com, pro, "GCN")
    ref_gin = _reference_forward(params, com, pro, "GIN")

    assert out_gcn.shape == (B, 1) and out_gin.shape == (B, 1)
    assert both_gcn.shape == (B, 1) and both_gin.shape == (B, 1)
    assert jnp.allclose(out_gcn, ref_gcn, atol=1e-2, rtol=1e-2)
    assert jnp.allclose(out_gin, ref_gin, atol=1e-2, rtol=1e-2)
    assert jnp.allclose(both_gcn, out_gcn, atol=1e-5, rtol=1e-5)
    assert jnp.allclose(both_gin, out_gin, atol=1e-5, rtol=1e-5)

    print("KERNEL_OK")
</pallas_src>

<mosaic_0001>
module attributes {stable_mosaic.version = 11 : i64} {
  func.func @_single_head_kernel(%arg0: i32, %arg1: memref<8x128xbf16, #tpu.memory_space<vmem>>, %arg2: memref<8x128xbf16, #tpu.memory_space<vmem>>, %arg3: memref<256x1024xbf16, #tpu.memory_space<vmem>>, %arg4: memref<1x1024xf32, #tpu.memory_space<vmem>>, %arg5: memref<1024x512xbf16, #tpu.memory_space<vmem>>, %arg6: memref<1x512xf32, #tpu.memory_space<vmem>>, %arg7: memref<512x128xbf16, #tpu.memory_space<vmem>>, %arg8: memref<1x128xf32, #tpu.memory_space<vmem>>, %arg9: memref<8x128xf32, #tpu.memory_space<vmem>>) attributes {dimension_semantics = [#tpu.dimension_semantics<parallel>], iteration_bounds = array<i64: 1>, scalar_prefetch = 0 : i64, scratch_operands = 0 : i64, tpu.core_type = #tpu.core_type<tc>, window_params = [{transform_indices = @transform_0, window_bounds = array<i64: 8, 128>}, {transform_indices = @transform_1, window_bounds = array<i64: 8, 128>}, {pipeline_mode = #tpu.pipeline_mode<synchronous>, transform_indices = @transform_2, window_bounds = array<i64: 256, 1024>}, {pipeline_mode = #tpu.pipeline_mode<synchronous>, transform_indices = @transform_3, window_bounds = array<i64: 1, 1024>}, {pipeline_mode = #tpu.pipeline_mode<synchronous>, transform_indices = @transform_4, window_bounds = array<i64: 1024, 512>}, {pipeline_mode = #tpu.pipeline_mode<synchronous>, transform_indices = @transform_5, window_bounds = array<i64: 1, 512>}, {pipeline_mode = #tpu.pipeline_mode<synchronous>, transform_indices = @transform_6, window_bounds = array<i64: 512, 128>}, {pipeline_mode = #tpu.pipeline_mode<synchronous>, transform_indices = @transform_7, window_bounds = array<i64: 1, 128>}, {transform_indices = @transform_8, window_bounds = array<i64: 8, 128>}]} {
    %c0 = arith.constant 0 : index
    %c0_0 = arith.constant 0 : index
    %0 = vector.load %arg1[%c0, %c0_0] : memref<8x128xbf16, #tpu.memory_space<vmem>>, vector<8x128xbf16>
    %c0_1 = arith.constant 0 : index
    %c0_2 = arith.constant 0 : index
    %1 = vector.load %arg2[%c0_1, %c0_2] : memref<8x128xbf16, #tpu.memory_space<vmem>>, vector<8x128xbf16>
    %c0_3 = arith.constant 0 : index
    %c0_4 = arith.constant 0 : index
    %2 = vector.load %arg3[%c0_3, %c0_4] : memref<256x1024xbf16, #tpu.memory_space<vmem>>, vector<128x1024xbf16>
    %cst = arith.constant dense<0.000000e+00> : vector<8x1024xf32>
    %3 = tpu.matmul %0, %2, %cst {dimension_numbers = #tpu.dot_dimension_numbers<[1], [0], [0], [1], [0, 0, 1, 1], [], []>} : vector<8x128xbf16>, vector<128x1024xbf16>, vector<8x1024xf32> -> vector<8x1024xf32>
    %c128 = arith.constant 128 : index
    %c0_5 = arith.constant 0 : index
    %4 = vector.load %arg3[%c128, %c0_5] : memref<256x1024xbf16, #tpu.memory_space<vmem>>, vector<128x1024xbf16>
    %cst_6 = arith.constant dense<0.000000e+00> : vector<8x1024xf32>
    %5 = tpu.matmul %1, %4, %cst_6 {dimension_numbers = #tpu.dot_dimension_numbers<[1], [0], [0], [1], [0, 0, 1, 1], [], []>} : vector<8x128xbf16>, vector<128x1024xbf16>, vector<8x1024xf32> -> vector<8x1024xf32>
    %6 = arith.addf %3, %5 : vector<8x1024xf32>
    %c0_7 = arith.constant 0 : index
    %c0_8 = arith.constant 0 : index
    %7 = vector.load %arg4[%c0_7, %c0_8] : memref<1x1024xf32, #tpu.memory_space<vmem>>, vector<1x1024xf32>
    %8 = vector.broadcast %7 : vector<1x1024xf32> to vector<8x1024xf32>
    %9 = arith.addf %6, %8 : vector<8x1024xf32>
    %cst_9 = arith.constant 0.000000e+00 : f32
    %10 = vector.broadcast %cst_9 : f32 to vector<8x1024xf32>
    %11 = arith.maximumf %9, %10 : vector<8x1024xf32>
    %12 = arith.truncf %11 : vector<8x1024xf32> to vector<8x1024xbf16>
    %c0_10 = arith.constant 0 : index
    %c0_11 = arith.constant 0 : index
    %13 = vector.load %arg5[%c0_10, %c0_11] : memref<1024x512xbf16, #tpu.memory_space<vmem>>, vector<1024x512xbf16>
    %cst_12 = arith.constant dense<0.000000e+00> : vector<8x512xf32>
    %14 = tpu.matmul %12, %13, %cst_12 {dimension_numbers = #tpu.dot_dimension_numbers<[1], [0], [0], [1], [0, 0, 1, 1], [], []>} : vector<8x1024xbf16>, vector<1024x512xbf16>, vector<8x512xf32> -> vector<8x512xf32>
    %c0_13 = arith.constant 0 : index
    %c0_14 = arith.constant 0 : index
    %15 = vector.load %arg6[%c0_13, %c0_14] : memref<1x512xf32, #tpu.memory_space<vmem>>, vector<1x512xf32>
    %16 = vector.broadcast %15 : vector<1x512xf32> to vector<8x512xf32>
    %17 = arith.addf %14, %16 : vector<8x512xf32>
    %cst_15 = arith.constant 0.000000e+00 : f32
    %18 = vector.broadcast %cst_15 : f32 to vector<8x512xf32>
    %19 = arith.maximumf %17, %18 : vector<8x512xf32>
    %20 = arith.truncf %19 : vector<8x512xf32> to vector<8x512xbf16>
    %c0_16 = arith.constant 0 : index
    %c0_17 = arith.constant 0 : index
    %21 = vector.load %arg7[%c0_16, %c0_17] : memref<512x128xbf16, #tpu.memory_space<vmem>>, vector<512x128xbf16>
    %cst_18 = arith.constant dense<0.000000e+00> : vector<8x128xf32>
    %22 = tpu.matmul %20, %21, %cst_18 {dimension_numbers = #tpu.dot_dimension_numbers<[1], [0], [0], [1], [0, 0, 1, 1], [], []>} : vector<8x512xbf16>, vector<512x128xbf16>, vector<8x128xf32> -> vector<8x128xf32>
    %c0_19 = arith.constant 0 : index
    %c0_20 = arith.constant 0 : index
    %23 = vector.load %arg8[%c0_19, %c0_20] : memref<1x128xf32, #tpu.memory_space<vmem>>, vector<1x128xf32>
    %24 = vector.broadcast %23 : vector<1x128xf32> to vector<8x128xf32>
    %25 = arith.addf %22, %24 : vector<8x128xf32>
    %c0_21 = arith.constant 0 : index
    %c0_22 = arith.constant 0 : index
    %26 = vector.load %arg9[%c0_21, %c0_22] : memref<8x128xf32, #tpu.memory_space<vmem>>, vector<8x128xf32>
    tpu.vector_store %arg9[%c0_21, %c0_22], %25 {strides = array<i32>} : memref<8x128xf32, #tpu.memory_space<vmem>>, vector<8x128xf32>,
    return
  }
  func.func @transform_0(%arg0: i32) -> (i32, i32) {
    %c0_i32 = arith.constant 0 : i32
    %c0_i32_0 = arith.constant 0 : i32
    return %arg0, %c0_i32 : i32, i32
  }
  func.func @transform_1(%arg0: i32) -> (i32, i32) {
    %c0_i32 = arith.constant 0 : i32
    %c0_i32_0 = arith.constant 0 : i32
    return %arg0, %c0_i32 : i32, i32
  }
  func.func @transform_2(%arg0: i32) -> (i32, i32) {
    %c0_i32 = arith.constant 0 : i32
    %c0_i32_0 = arith.constant 0 : i32
    %c0_i32_1 = arith.constant 0 : i32
    return %c0_i32, %c0_i32_0 : i32, i32
  }
  func.func @transform_3(%arg0: i32) -> (i32, i32) {
    %c0_i32 = arith.constant 0 : i32
    %c0_i32_0 = arith.constant 0 : i32
    %c0_i32_1 = arith.constant 0 : i32
    return %c0_i32, %c0_i32_0 : i32, i32
  }
  func.func @transform_4(%arg0: i32) -> (i32, i32) {
    %c0_i32 = arith.constant 0 : i32
    %c0_i32_0 = arith.constant 0 : i32
    %c0_i32_1 = arith.constant 0 : i32
    return %c0_i32, %c0_i32_0 : i32, i32
  }
  func.func @transform_5(%arg0: i32) -> (i32, i32) {
    %c0_i32 = arith.constant 0 : i32
    %c0_i32_0 = arith.constant 0 : i32
    %c0_i32_1 = arith.constant 0 : i32
    return %c0_i32, %c0_i32_0 : i32, i32
  }
  func.func @transform_6(%arg0: i32) -> (i32, i32) {
    %c0_i32 = arith.constant 0 : i32
    %c0_i32_0 = arith.constant 0 : i32
    %c0_i32_1 = arith.constant 0 : i32
    return %c0_i32, %c0_i32_0 : i32, i32
  }
  func.func @transform_7(%arg0: i32) -> (i32, i32) {
    %c0_i32 = arith.constant 0 : i32
    %c0_i32_0 = arith.constant 0 : i32
    %c0_i32_1 = arith.constant 0 : i32
    return %c0_i32, %c0_i32_0 : i32, i32
  }
  func.func @transform_8(%arg0: i32) -> (i32, i32) {
    %c0_i32 = arith.constant 0 : i32
    %c0_i32_0 = arith.constant 0 : i32
    return %arg0, %c0_i32 : i32, i32
  }
}

</mosaic_0001>

<llo_original>
// kernel: tpu_custom_call.1
$region0: #{tpu_custom_call.1}
  #allocation0 [shape = 'u32[]', space=smem, size = 0x4, offset = 0x4, fixed_abs, tag = 'smem constant byte address 0x4 - core index']
  #allocation1 [shape = 'u32[144,128]{1,0:T(1,128)}', space=vmem, size = 0x12000, scoped, tag = 'internal scratch']
  %s0 = inlined_call_operand.hbm [shape: bf16[8,128], index: 0, kind: input, shape index: {}]
  %s1 = inlined_call_operand.hbm [shape: bf16[8,128], index: 1, kind: input, shape index: {}]
  %s2 = inlined_call_operand.hbm [shape: bf16[256,1024], index: 2, kind: input, shape index: {}]
  %s3 = inlined_call_operand.vmem [shape: f32[1,1024], index: 3, kind: input, shape index: {}]
  %s4 = inlined_call_operand.hbm [shape: bf16[1024,512], index: 4, kind: input, shape index: {}]
  %s5 = inlined_call_operand.vmem [shape: f32[1,512], index: 5, kind: input, shape index: {}]
  %s6 = inlined_call_operand.hbm [shape: bf16[512,128], index: 6, kind: input, shape index: {}]
  %s7 = inlined_call_operand.vmem [shape: f32[1,128], index: 7, kind: input, shape index: {}]
  %s8 = inlined_call_operand.hbm [shape: f32[8,128], index: 8, kind: output, shape index: {}]
  %s9 = sld [smem:[#allocation0]]
  $region62: #{tpu_custom_call.1} parent=0
    _
  %s11 = ssub.s32 1, %s9
  %s12 = scalar_select 0, %s11, %s9
  $region1: #{tpu_custom_call.1} parent=0
    #allocation2 [shape = 'u8[2048]{0}', space=vmem, size = 0x800, scoped, tag = 'input window, operand 0, single buffered']
    #allocation3 [shape = 's32[1]{0}', space=sflag, size = 0x4, scoped, tag = 'scoped memory for tpu_custom_call.1']
    #allocation4 [shape = 's32[1]{0}', space=sflag, size = 0x4, scoped, tag = 'scoped memory for tpu_custom_call.1']
    #allocation5 [shape = 'u8[2048]{0}', space=vmem, size = 0x800, scoped, tag = 'input window, operand 1, single buffered']
    #allocation6 [shape = 's32[1]{0}', space=sflag, size = 0x4, scoped, tag = 'scoped memory for tpu_custom_call.1']
    #allocation7 [shape = 'u8[524288]{0}', space=vmem, size = 0x80000, scoped, tag = 'input window, operand 2, single buffered']
    #allocation8 [shape = 'u8[1048576]{0}', space=vmem, size = 0x100000, scoped, tag = 'input window, operand 4, single buffered']
    #allocation9 [shape = 's32[1]{0}', space=sflag, size = 0x4, scoped, tag = 'scoped memory for tpu_custom_call.1']
    #allocation10 [shape = 'u8[131072]{0}', space=vmem, size = 0x20000, scoped, tag = 'input window, operand 6, single buffered']
    #allocation11 [shape = 'u8[4096]{0}', space=vmem, size = 0x1000, scoped, tag = 'output window, operand 0, single buffered']
    %13 = vsyncpa [#allocation3], 0
    %14 = vsyncpa [#allocation6], 0
    %15 = vsyncpa [#allocation9], 0
    %16 = vsyncpa [#allocation4], 0
    // Predicated region
    $region2: #{tpu_custom_call.1} parent=1 // pred_check
      _
    $region3: #{tpu_custom_call.1} parent=1 // pred_check_branch
      %18 = sbr.rel (0) target = $region5
    $region4: #{tpu_custom_call.1} parent=1 // pred_region
      %s20 = ssub.s32 64, 64
      %21 = vsyncadd [#allocation3], %s20
      %s23 = sshll.u32 [#allocation2], 4
      %s24 = int_to_ptr.vmem [resolvable:$true] %s23
      %26 = dma.hbm_to_vmem [thread:$0]  %s0, 64, %s24, [#allocation3]
    $region5: #{tpu_custom_call.1} parent=1 // pred_fallthru
      _
    // Predicated region
    $region6: #{tpu_custom_call.1} parent=1 // pred_check
      _
    $region7: #{tpu_custom_call.1} parent=1 // pred_check_branch
      %28 = sbr.rel (0) target = $region9
    $region8: #{tpu_custom_call.1} parent=1 // pred_region
      %s30 = ssub.s32 64, 64
      %31 = vsyncadd [#allocation6], %s30
      %s33 = sshll.u32 [#allocation5], 4
      %s34 = int_to_ptr.vmem [resolvable:$true] %s33
      %36 = dma.hbm_to_vmem [thread:$0]  %s1, 64, %s34, [#allocation6]
    $region9: #{tpu_custom_call.1} parent=1 // pred_fallthru
      _
    // Predicated region
    $region10: #{tpu_custom_call.1} parent=1 // pred_check
      _
    $region11: #{tpu_custom_call.1} parent=1 // pred_check_branch
      %38 = sbr.rel (0) target = $region13
    $region12: #{tpu_custom_call.1} parent=1 // pred_region
      %s40 = ssub.s32 16384, 16384
      %41 = vsyncadd [#allocation6], %s40
      %s42 = sshll.u32 [#allocation7], 4
      %s43 = int_to_ptr.vmem [resolvable:$true] %s42
      %48 = dma.hbm_to_vmem [thread:$0]  %s2, 16384, %s43, [#allocation6], 512, 512, 32
    $region13: #{tpu_custom_call.1} parent=1 // pred_fallthru
      _
    // Predicated region
    $region14: #{tpu_custom_call.1} parent=1 // pred_check
      _
    $region15: #{tpu_custom_call.1} parent=1 // pred_check_branch
      %50 = sbr.rel (0) target = $region17
    $region16: #{tpu_custom_call.1} parent=1 // pred_region
      _
    $region17: #{tpu_custom_call.1} parent=1 // pred_fallthru
      _
    // Predicated region
    $region18: #{tpu_custom_call.1} parent=1 // pred_check
      _
    $region19: #{tpu_custom_call.1} parent=1 // pred_check_branch
      %52 = sbr.rel (0) target = $region21
    $region20: #{tpu_custom_call.1} parent=1 // pred_region
      %s54 = ssub.s32 32768, 32768
      %55 = vsyncadd [#allocation9], %s54
      %s56 = sshll.u32 [#allocation8], 4
      %s57 = int_to_ptr.vmem [resolvable:$true] %s56
      %62 = dma.hbm_to_vmem [thread:$0]  %s4, 32768, %s57, [#allocation9], 256, 256, 16
    $region21: #{tpu_custom_call.1} parent=1 // pred_fallthru
      _
    // Predicated region
    $region22: #{tpu_custom_call.1} parent=1 // pred_check
      _
    $region23: #{tpu_custom_call.1} parent=1 // pred_check_branch
      %64 = sbr.rel (0) target = $region25
    $region24: #{tpu_custom_call.1} parent=1 // pred_region
      _
    $region25: #{tpu_custom_call.1} parent=1 // pred_fallthru
      _
    // Predicated region
    $region26: #{tpu_custom_call.1} parent=1 // pred_check
      _
    $region27: #{tpu_custom_call.1} parent=1 // pred_check_branch
      %66 = sbr.rel (0) target = $region29
    $region28: #{tpu_custom_call.1} parent=1 // pred_region
      %s68 = ssub.s32 4096, 4096
      %69 = vsyncadd [#allocation9], %s68
      %s70 = sshll.u32 [#allocation10], 4
      %s71 = int_to_ptr.vmem [resolvable:$true] %s70
      %76 = dma.hbm_to_vmem [thread:$0]  %s6, 4096, %s71, [#allocation9], 64, 64, 4
    $region29: #{tpu_custom_call.1} parent=1 // pred_fallthru
      _
    // Predicated region
    $region30: #{tpu_custom_call.1} parent=1 // pred_check
      _
    $region31: #{tpu_custom_call.1} parent=1 // pred_check_branch
      %78 = sbr.rel (0) target = $region33
    $region32: #{tpu_custom_call.1} parent=1 // pred_region
      _
    $region33: #{tpu_custom_call.1} parent=1 // pred_fallthru
      _
    // Predicated region
    $region34: #{tpu_custom_call.1} parent=1 // pred_check
      _
    $region35: #{tpu_custom_call.1} parent=1 // pred_check_branch
      %80 = sbr.rel (0) target = $region37
    $region36: #{tpu_custom_call.1} parent=1 // pred_region
      %81 = dma.done [#allocation3], 64
    $region37: #{tpu_custom_call.1} parent=1 // pred_fallthru
      _
    // Predicated region
    $region38: #{tpu_custom_call.1} parent=1 // pred_check
      _
    $region39: #{tpu_custom_call.1} parent=1 // pred_check_branch
      %83 = sbr.rel (0) target = $region41
    $region40: #{tpu_custom_call.1} parent=1 // pred_region
      %84 = dma.done [#allocation6], 64
    $region41: #{tpu_custom_call.1} parent=1 // pred_fallthru
      _
    // Predicated region
    $region42: #{tpu_custom_call.1} parent=1 // pred_check
      _
    $region43: #{tpu_custom_call.1} parent=1 // pred_check_branch
      %86 = sbr.rel (0) target = $region45
    $region44: #{tpu_custom_call.1} parent=1 // pred_region
      %87 = dma.done [#allocation6], 16384
    $region45: #{tpu_custom_call.1} parent=1 // pred_fallthru
      _
    // Predicated region
    $region46: #{tpu_custom_call.1} parent=1 // pred_check
      _
    $region47: #{tpu_custom_call.1} parent=1 // pred_check_branch
      %89 = sbr.rel (0) target = $region49
    $region48: #{tpu_custom_call.1} parent=1 // pred_region
      %90 = dma.done [#allocation9], 32768
    $region49: #{tpu_custom_call.1} parent=1 // pred_fallthru
      _
    // Predicated region
    $region50: #{tpu_custom_call.1} parent=1 // pred_check
      _
    $region51: #{tpu_custom_call.1} parent=1 // pred_check_branch
      %92 = sbr.rel (0) target = $region53
    $region52: #{tpu_custom_call.1} parent=1 // pred_region
      %93 = dma.done [#allocation9], 4096
    $region53: #{tpu_custom_call.1} parent=1 // pred_fallthru
      _
    %v95 = vld [vmem:[#allocation2] sm:$0xf]
    %v96 = vld [vmem:[#allocation5] sm:$0xf]
    %v97 = vld [vmem:[#allocation7] sm:$0xff]
    %v98 = vld [vmem:[#allocation7 + $0x8] sm:$0xff]
    %v99 = vld [vmem:[#allocation7 + $0x10] sm:$0xff]
    %v100 = vld [vmem:[#allocation7 + $0x18] sm:$0xff]
    %v101 = vld [vmem:[#allocation7 + $0x20] sm:$0xff]
    %v102 = vld [vmem:[#allocation7 + $0x28] sm:$0xff]
    %v103 = vld [vmem:[#allocation7 + $0x30] sm:$0xff]
    %v104 = vld [vmem:[#allocation7 + $0x38] sm:$0xff]
    %v105 = vld [vmem:[#allocation7 + $0x40] sm:$0xff]
    %v106 = vld [vmem:[#allocation7 + $0x48] sm:$0xff]
    %v107 = vld [vmem:[#allocation7 + $0x50] sm:$0xff]
    %v108 = vld [vmem:[#allocation7 + $0x58] sm:$0xff]
    %v109 = vld [vmem:[#allocation7 + $0x60] sm:$0xff]
    %v110 = vld [vmem:[#allocation7 + $0x68] sm:$0xff]
    %v111 = vld [vmem:[#allocation7 + $0x70] sm:$0xff]
    %v112 = vld [vmem:[#allocation7 + $0x78] sm:$0xff]
    %v113 = vld [vmem:[#allocation7 + $0x80] sm:$0xff]
    %v114 = vld [vmem:[#allocation7 + $0x88] sm:$0xff]
    %v115 = vld [vmem:[#allocation7 + $0x90] sm:$0xff]
    %v116 = vld [vmem:[#allocation7 + $0x98] sm:$0xff]
    %v117 = vld [vmem:[#allocation7 + $0xa0] sm:$0xff]
    %v118 = vld [vmem:[#allocation7 + $0xa8] sm:$0xff]
    %v119 = vld [vmem:[#allocation7 + $0xb0] sm:$0xff]
    %v120 = vld [vmem:[#allocation7 + $0xb8] sm:$0xff]
    %v121 = vld [vmem:[#allocation7 + $0xc0] sm:$0xff]
    %v122 = vld [vmem:[#allocation7 + $0xc8] sm:$0xff]
    %v123 = vld [vmem:[#allocation7 + $0xd0] sm:$0xff]
    %v124 = vld [vmem:[#allocation7 + $0xd8] sm:$0xff]
    %v125 = vld [vmem:[#allocation7 + $0xe0] sm:$0xff]
    %v126 = vld [vmem:[#allocation7 + $0xe8] sm:$0xff]
    %v127 = vld [vmem:[#allocation7 + $0xf0] sm:$0xff]
    %v128 = vld [vmem:[#allocation7 + $0xf8] sm:$0xff]
    %v129 = vld [vmem:[#allocation7 + $0x100] sm:$0xff]
    %v130 = vld [vmem:[#allocation7 + $0x108] sm:$0xff]
    %v131 = vld [vmem:[#allocation7 + $0x110] sm:$0xff]
    %v132 = vld [vmem:[#allocation7 + $0x118] sm:$0xff]
    %v133 = vld [vmem:[#allocation7 + $0x120] sm:$0xff]
    %v134 = vld [vmem:[#allocation7 + $0x128] sm:$0xff]
    %v135 = vld [vmem:[#allocation7 + $0x130] sm:$0xff]
    %v136 = vld [vmem:[#allocation7 + $0x138] sm:$0xff]
    %v137 = vld [vmem:[#allocation7 + $0x140] sm:$0xff]
    %v138 = vld [vmem:[#allocation7 + $0x148] sm:$0xff]
    %v139 = vld [vmem:[#allocation7 + $0x150] sm:$0xff]
    %v140 = vld [vmem:[#allocation7 + $0x158] sm:$0xff]
    %v141 = vld [vmem:[#allocation7 + $0x160] sm:$0xff]
    %v142 = vld [vmem:[#allocation7 + $0x168] sm:$0xff]
    %v143 = vld [vmem:[#allocation7 + $0x170] sm:$0xff]
    %v144 = vld [vmem:[#allocation7 + $0x178] sm:$0xff]
    %v145 = vld [vmem:[#allocation7 + $0x180] sm:$0xff]
    %v146 = vld [vmem:[#allocation7 + $0x188] sm:$0xff]
    %v147 = vld [vmem:[#allocation7 + $0x190] sm:$0xff]
    %v148 = vld [vmem:[#allocation7 + $0x198] sm:$0xff]
    %v149 = vld [vmem:[#allocation7 + $0x1a0] sm:$0xff]
    %v150 = vld [vmem:[#allocation7 + $0x1a8] sm:$0xff]
    %v151 = vld [vmem:[#allocation7 + $0x1b0] sm:$0xff]
    %v152 = vld [vmem:[#allocation7 + $0x1b8] sm:$0xff]
    %v153 = vld [vmem:[#allocation7 + $0x1c0] sm:$0xff]
    %v154 = vld [vmem:[#allocation7 + $0x1c8] sm:$0xff]
    %v155 = vld [vmem:[#allocation7 + $0x1d0] sm:$0xff]
    %v156 = vld [vmem:[#allocation7 + $0x1d8] sm:$0xff]
    %v157 = vld [vmem:[#allocation7 + $0x1e0] sm:$0xff]
    %v158 = vld [vmem:[#allocation7 + $0x1e8] sm:$0xff]
    %v159 = vld [vmem:[#allocation7 + $0x1f0] sm:$0xff]
    %v160 = vld [vmem:[#allocation7 + $0x1f8] sm:$0xff]
    %v161 = vld [vmem:[#allocation7 + $0x200] sm:$0xff]
    %v162 = vld [vmem:[#allocation7 + $0x208] sm:$0xff]
    %v163 = vld [vmem:[#allocation7 + $0x210] sm:$0xff]
    %v164 = vld [vmem:[#allocation7 + $0x218] sm:$0xff]
    %v165 = vld [vmem:[#allocation7 + $0x220] sm:$0xff]
    %v166 = vld [vmem:[#allocation7 + $0x228] sm:$0xff]
    %v167 = vld [vmem:[#allocation7 + $0x230] sm:$0xff]
    %v168 = vld [vmem:[#allocation7 + $0x238] sm:$0xff]
    %v169 = vld [vmem:[#allocation7 + $0x240] sm:$0xff]
    %v170 = vld [vmem:[#allocation7 + $0x248] sm:$0xff]
    %v171 = vld [vmem:[#allocation7 + $0x250] sm:$0xff]
    %v172 = vld [vmem:[#allocation7 + $0x258] sm:$0xff]
    %v173 = vld [vmem:[#allocation7 + $0x260] sm:$0xff]
    %v174 = vld [vmem:[#allocation7 + $0x268] sm:$0xff]
    %v175 = vld [vmem:[#allocation7 + $0x270] sm:$0xff]
    %v176 = vld [vmem:[#allocation7 + $0x278] sm:$0xff]
    %v177 = vld [vmem:[#allocation7 + $0x280] sm:$0xff]
    %v178 = vld [vmem:[#allocation7 + $0x288] sm:$0xff]
    %v179 = vld [vmem:[#allocation7 + $0x290] sm:$0xff]
    %v180 = vld [vmem:[#allocation7 + $0x298] sm:$0xff]
    %v181 = vld [vmem:[#allocation7 + $0x2a0] sm:$0xff]
    %v182 = vld [vmem:[#allocation7 + $0x2a8] sm:$0xff]
    %v183 = vld [vmem:[#allocation7 + $0x2b0] sm:$0xff]
    %v184 = vld [vmem:[#allocation7 + $0x2b8] sm:$0xff]
    %v185 = vld [vmem:[#allocation7 + $0x2c0] sm:$0xff]
    %v186 = vld [vmem:[#allocation7 + $0x2c8] sm:$0xff]
    %v187 = vld [vmem:[#allocation7 + $0x2d0] sm:$0xff]
    %v188 = vld [vmem:[#allocation7 + $0x2d8] sm:$0xff]
    %v189 = vld [vmem:[#allocation7 + $0x2e0] sm:$0xff]
    %v190 = vld [vmem:[#allocation7 + $0x2e8] sm:$0xff]
    %v191 = vld [vmem:[#allocation7 + $0x2f0] sm:$0xff]
    %v192 = vld [vmem:[#allocation7 + $0x2f8] sm:$0xff]
    %v193 = vld [vmem:[#allocation7 + $0x300] sm:$0xff]
    %v194 = vld [vmem:[#allocation7 + $0x308] sm:$0xff]
    %v195 = vld [vmem:[#allocation7 + $0x310] sm:$0xff]
    %v196 = vld [vmem:[#allocation7 + $0x318] sm:$0xff]
    %v197 = vld [vmem:[#allocation7 + $0x320] sm:$0xff]
    %v198 = vld [vmem:[#allocation7 + $0x328] sm:$0xff]
    %v199 = vld [vmem:[#allocation7 + $0x330] sm:$0xff]
    %v200 = vld [vmem:[#allocation7 + $0x338] sm:$0xff]
    %v201 = vld [vmem:[#allocation7 + $0x340] sm:$0xff]
    %v202 = vld [vmem:[#allocation7 + $0x348] sm:$0xff]
    %v203 = vld [vmem:[#allocation7 + $0x350] sm:$0xff]
    %v204 = vld [vmem:[#allocation7 + $0x358] sm:$0xff]
    %v205 = vld [vmem:[#allocation7 + $0x360] sm:$0xff]
    %v206 = vld [vmem:[#allocation7 + $0x368] sm:$0xff]
    %v207 = vld [vmem:[#allocation7 + $0x370] sm:$0xff]
    %v208 = vld [vmem:[#allocation7 + $0x378] sm:$0xff]
    %v209 = vld [vmem:[#allocation7 + $0x380] sm:$0xff]
    %v210 = vld [vmem:[#allocation7 + $0x388] sm:$0xff]
    %v211 = vld [vmem:[#allocation7 + $0x390] sm:$0xff]
    %v212 = vld [vmem:[#allocation7 + $0x398] sm:$0xff]
    %v213 = vld [vmem:[#allocation7 + $0x3a0] sm:$0xff]
    %v214 = vld [vmem:[#allocation7 + $0x3a8] sm:$0xff]
    %v215 = vld [vmem:[#allocation7 + $0x3b0] sm:$0xff]
    %v216 = vld [vmem:[#allocation7 + $0x3b8] sm:$0xff]
    %v217 = vld [vmem:[#allocation7 + $0x3c0] sm:$0xff]
    %v218 = vld [vmem:[#allocation7 + $0x3c8] sm:$0xff]
    %v219 = vld [vmem:[#allocation7 + $0x3d0] sm:$0xff]
    %v220 = vld [vmem:[#allocation7 + $0x3d8] sm:$0xff]
    %v221 = vld [vmem:[#allocation7 + $0x3e0] sm:$0xff]
    %v222 = vld [vmem:[#allocation7 + $0x3e8] sm:$0xff]
    %v223 = vld [vmem:[#allocation7 + $0x3f0] sm:$0xff]
    %v224 = vld [vmem:[#allocation7 + $0x3f8] sm:$0xff]
    %v289 = vunpack.c.l.b16 %v161
    %v290 = vunpack.c.h.b16 %v161
    %v291 = vunpack.c.l.b16 %v162
    %v292 = vunpack.c.h.b16 %v162
    %v293 = vunpack.c.l.b16 %v163
    %v294 = vunpack.c.h.b16 %v163
    %v295 = vunpack.c.l.b16 %v164
    %v296 = vunpack.c.h.b16 %v164
    %v297 = vunpack.c.l.b16 %v165
    %v298 = vunpack.c.h.b16 %v165
    %v299 = vunpack.c.l.b16 %v166
    %v300 = vunpack.c.h.b16 %v166
    %v301 = vunpack.c.l.b16 %v167
    %v302 = vunpack.c.h.b16 %v167
    %v303 = vunpack.c.l.b16 %v168
    %v304 = vunpack.c.h.b16 %v168
    %v305 = vunpack.c.l.b16 %v169
    %v306 = vunpack.c.h.b16 %v169
    %v307 = vunpack.c.l.b16 %v170
    %v308 = vunpack.c.h.b16 %v170
    %v309 = vunpack.c.l.b16 %v171
    %v310 = vunpack.c.h.b16 %v171
    %v311 = vunpack.c.l.b16 %v172
    %v312 = vunpack.c.h.b16 %v172
    %v313 = vunpack.c.l.b16 %v173
    %v314 = vunpack.c.h.b16 %v173
    %v315 = vunpack.c.l.b16 %v174
    %v316 = vunpack.c.h.b16 %v174
    %v317 = vunpack.c.l.b16 %v175
    %v318 = vunpack.c.h.b16 %v175
    %v319 = vunpack.c.l.b16 %v176
    %v320 = vunpack.c.h.b16 %v176
    %v321 = vunpack.c.l.b16 %v177
    %v322 = vunpack.c.h.b16 %v177
    %v323 = vunpack.c.l.b16 %v178
    %v324 = vunpack.c.h.b16 %v178
    %v325 = vunpack.c.l.b16 %v179
    %v326 = vunpack.c.h.b16 %v179
    %v327 = vunpack.c.l.b16 %v180
    %v328 = vunpack.c.h.b16 %v180
    %v329 = vunpack.c.l.b16 %v181
    %v330 = vunpack.c.h.b16 %v181
    %v331 = vunpack.c.l.b16 %v182
    %v332 = vunpack.c.h.b16 %v182
    %v333 = vunpack.c.l.b16 %v183
    %v334 = vunpack.c.h.b16 %v183
    %v335 = vunpack.c.l.b16 %v184
    %v336 = vunpack.c.h.b16 %v184
    %v337 = vunpack.c.l.b16 %v185
    %v338 = vunpack.c.h.b16 %v185
    %v339 = vunpack.c.l.b16 %v186
    %v340 = vunpack.c.h.b16 %v186
    %v341 = vunpack.c.l.b16 %v187
    %v342 = vunpack.c.h.b16 %v187
    %v343 = vunpack.c.l.b16 %v188
    %v344 = vunpack.c.h.b16 %v188
    %v345 = vunpack.c.l.b16 %v189
    %v346 = vunpack.c.h.b16 %v189
    %v347 = vunpack.c.l.b16 %v190
    %v348 = vunpack.c.h.b16 %v190
    %v349 = vunpack.c.l.b16 %v191
    %v350 = vunpack.c.h.b16 %v191
    %v351 = vunpack.c.l.b16 %v192
    %v352 = vunpack.c.h.b16 %v192
    %v353 = vunpack.c.l.b16 %v193
    %v354 = vunpack.c.h.b16 %v193
    %v355 = vunpack.c.l.b16 %v194
    %v356 = vunpack.c.h.b16 %v194
    %v357 = vunpack.c.l.b16 %v195
    %v358 = vunpack.c.h.b16 %v195
    %v359 = vunpack.c.l.b16 %v196
    %v360 = vunpack.c.h.b16 %v196
    %v361 = vunpack.c.l.b16 %v197
    %v362 = vunpack.c.h.b16 %v197
    %v363 = vunpack.c.l.b16 %v198
    %v364 = vunpack.c.h.b16 %v198
    %v365 = vunpack.c.l.b16 %v199
    %v366 = vunpack.c.h.b16 %v199
    %v367 = vunpack.c.l.b16 %v200
    %v368 = vunpack.c.h.b16 %v200
    %v369 = vunpack.c.l.b16 %v201
    %v370 = vunpack.c.h.b16 %v201
    %v371 = vunpack.c.l.b16 %v202
    %v372 = vunpack.c.h.b16 %v202
    %v373 = vunpack.c.l.b16 %v203
    %v374 = vunpack.c.h.b16 %v203
    %v375 = vunpack.c.l.b16 %v204
    %v376 = vunpack.c.h.b16 %v204
    %v377 = vunpack.c.l.b16 %v205
    %v378 = vunpack.c.h.b16 %v205
    %v379 = vunpack.c.l.b16 %v206
    %v380 = vunpack.c.h.b16 %v206
    %v381 = vunpack.c.l.b16 %v207
    %v382 = vunpack.c.h.b16 %v207
    %v383 = vunpack.c.l.b16 %v208
    %v384 = vunpack.c.h.b16 %v208
    %v385 = vunpack.c.l.b16 %v209
    %v386 = vunpack.c.h.b16 %v209
    %v387 = vunpack.c.l.b16 %v210
    %v388 = vunpack.c.h.b16 %v210
    %v389 = vunpack.c.l.b16 %v211
    %v390 = vunpack.c.h.b16 %v211
    %v391 = vunpack.c.l.b16 %v212
    %v392 = vunpack.c.h.b16 %v212
    %v393 = vunpack.c.l.b16 %v213
    %v394 = vunpack.c.h.b16 %v213
    %v395 = vunpack.c.l.b16 %v214
    %v396 = vunpack.c.h.b16 %v214
    %v397 = vunpack.c.l.b16 %v215
    %v398 = vunpack.c.h.b16 %v215
    %v399 = vunpack.c.l.b16 %v216
    %v400 = vunpack.c.h.b16 %v216
    %v401 = vunpack.c.l.b16 %v217
    %v402 = vunpack.c.h.b16 %v217
    %v403 = vunpack.c.l.b16 %v218
    %v404 = vunpack.c.h.b16 %v218
    %v405 = vunpack.c.l.b16 %v219
    %v406 = vunpack.c.h.b16 %v219
    %v407 = vunpack.c.l.b16 %v220
    %v408 = vunpack.c.h.b16 %v220
    %v409 = vunpack.c.l.b16 %v221
    %v410 = vunpack.c.h.b16 %v221
    %v411 = vunpack.c.l.b16 %v222
    %v412 = vunpack.c.h.b16 %v222
    %v413 = vunpack.c.l.b16 %v223
    %v414 = vunpack.c.h.b16 %v223
    %v415 = vunpack.c.l.b16 %v224
    %v416 = vunpack.c.h.b16 %v224
    %v417 = vpack.c.b16 %v297, %v289
    %v418 = vpack.c.b16 %v298, %v290
    %v419 = vpack.c.b16 %v299, %v291
    %v420 = vpack.c.b16 %v300, %v292
    %v421 = vpack.c.b16 %v301, %v293
    %v422 = vpack.c.b16 %v302, %v294
    %v423 = vpack.c.b16 %v303, %v295
    %v424 = vpack.c.b16 %v304, %v296
    %v425 = vpack.c.b16 %v313, %v305
    %v426 = vpack.c.b16 %v314, %v306
    %v427 = vpack.c.b16 %v315, %v307
    %v428 = vpack.c.b16 %v316, %v308
    %v429 = vpack.c.b16 %v317, %v309
    %v430 = vpack.c.b16 %v318, %v310
    %v431 = vpack.c.b16 %v319, %v311
    %v432 = vpack.c.b16 %v320, %v312
    %v433 = vpack.c.b16 %v329, %v321
    %v434 = vpack.c.b16 %v330, %v322
    %v435 = vpack.c.b16 %v331, %v323
    %v436 = vpack.c.b16 %v332, %v324
    %v437 = vpack.c.b16 %v333, %v325
    %v438 = vpack.c.b16 %v334, %v326
    %v439 = vpack.c.b16 %v335, %v327
    %v440 = vpack.c.b16 %v336, %v328
    %v441 = vpack.c.b16 %v345, %v337
    %v442 = vpack.c.b16 %v346, %v338
    %v443 = vpack.c.b16 %v347, %v339
    %v444 = vpack.c.b16 %v348, %v340
    %v445 = vpack.c.b16 %v349, %v341
    %v446 = vpack.c.b16 %v350, %v342
    %v447 = vpack.c.b16 %v351, %v343
    %v448 = vpack.c.b16 %v352, %v344
    %v449 = vpack.c.b16 %v361, %v353
    %v450 = vpack.c.b16 %v362, %v354
    %v451 = vpack.c.b16 %v363, %v355
    %v452 = vpack.c.b16 %v364, %v356
    %v453 = vpack.c.b16 %v365, %v357
    %v454 = vpack.c.b16 %v366, %v358
    %v455 = vpack.c.b16 %v367, %v359
    %v456 = vpack.c.b16 %v368, %v360
    %v457 = vpack.c.b16 %v377, %v369
    %v458 = vpack.c.b16 %v378, %v370
    %v459 = vpack.c.b16 %v379, %v371
    %v460 = vpack.c.b16 %v380, %v372
    %v461 = vpack.c.b16 %v381, %v373
    %v462 = vpack.c.b16 %v382, %v374
    %v463 = vpack.c.b16 %v383, %v375
    %v464 = vpack.c.b16 %v384, %v376
    %v465 = vpack.c.b16 %v393, %v385
    %v466 = vpack.c.b16 %v394, %v386
    %v467 = vpack.c.b16 %v395, %v387
    %v468 = vpack.c.b16 %v396, %v388
    %v469 = vpack.c.b16 %v397, %v389
    %v470 = vpack.c.b16 %v398, %v390
    %v471 = vpack.c.b16 %v399, %v391
    %v472 = vpack.c.b16 %v400, %v392
    %v473 = vpack.c.b16 %v409, %v401
    %v474 = vpack.c.b16 %v410, %v402
    %v475 = vpack.c.b16 %v411, %v403
    %v476 = vpack.c.b16 %v412, %v404
    %v477 = vpack.c.b16 %v413, %v405
    %v478 = vpack.c.b16 %v414, %v406
    %v479 = vpack.c.b16 %v415, %v407
    %v480 = vpack.c.b16 %v416, %v408
    %545 = vmatprep.subr.bf16.mxu0 %v418
    %546 = vmatpush1.bf16.msra.mxu0 %v417
    %547 = vmatprep.subr.bf16.mxu0 %v426
    %548 = vmatpush1.bf16.msra.mxu0 %v425
    %549 = vmatprep.subr.bf16.mxu0 %v434
    %550 = vmatpush1.bf16.msra.mxu0 %v433
    %551 = vmatprep.subr.bf16.mxu0 %v442
    %552 = vmatpush1.bf16.msra.mxu0 %v441
    %553 = vmatprep.subr.bf16.mxu0 %v450
    %554 = vmatpush1.bf16.msra.mxu0 %v449
    %555 = vmatprep.subr.bf16.mxu0 %v458
    %556 = vmatpush1.bf16.msra.mxu0 %v457
    %557 = vmatprep.subr.bf16.mxu0 %v466
    %558 = vmatpush1.bf16.msra.mxu0 %v465
    %559 = vmatprep.subr.bf16.mxu0 %v474
    %560 = vmatpush1.bf16.msra.mxu0 %v473
    %561 = vmatprep.subr.bf16.mxu0 0
    %562 = vmatpush1.bf16.msra.mxu0 0
    %563 = vmatprep.subr.bf16.mxu0 0
    %564 = vmatpush1.bf16.msra.mxu0 0
    %565 = vmatprep.subr.bf16.mxu0 0
    %566 = vmatpush1.bf16.msra.mxu0 0
    %567 = vmatprep.subr.bf16.mxu0 0
    %568 = vmatpush1.bf16.msra.mxu0 0
    %569 = vmatprep.subr.bf16.mxu0 0
    %570 = vmatpush1.bf16.msra.mxu0 0
    %571 = vmatprep.subr.bf16.mxu0 0
    %572 = vmatpush1.bf16.msra.mxu0 0
    %573 = vmatprep.subr.bf16.mxu0 0
    %574 = vmatpush1.bf16.msra.mxu0 0
    %575 = vmatprep.subr.bf16.mxu0 0
    %576 = vmatpush1.bf16.msra.mxu0 0
    %577 = vmatprep.mubr.bf16.mxu0 0
    %578 = vmatmul.mubr.bf16.gmra.mrb[0].mxu0 %v96
    %v579 = vpop.f32.mrb[0].mxu0
    %v580 = vadd.f32 0.0, %v579
    %v581 = vpop.f32.mrb[0].mxu0
    %v582 = vadd.f32 0.0, %v581
    %v583 = vpop.f32.mrb[0].mxu0
    %v584 = vpop.f32.mrb[0].mxu0
    %585 = vdwg.mxu0
    %586 = vmatprep.subr.bf16.mxu0 %v420
    %587 = vmatpush1.bf16.msra.mxu0 %v419
    %588 = vmatprep.subr.bf16.mxu0 %v428
    %589 = vmatpush1.bf16.msra.mxu0 %v427
    %590 = vmatprep.subr.bf16.mxu0 %v436
    %591 = vmatpush1.bf16.msra.mxu0 %v435
    %592 = vmatprep.subr.bf16.mxu0 %v444
    %593 = vmatpush1.bf16.msra.mxu0 %v443
    %594 = vmatprep.subr.bf16.mxu0 %v452
    %595 = vmatpush1.bf16.msra.mxu0 %v451
    %596 = vmatprep.subr.bf16.mxu0 %v460
    %597 = vmatpush1.bf16.msra.mxu0 %v459
    %598 = vmatprep.subr.bf16.mxu0 %v468
    %599 = vmatpush1.bf16.msra.mxu0 %v467
    %600 = vmatprep.subr.bf16.mxu0 %v476
    %601 = vmatpush1.bf16.msra.mxu0 %v475
    %602 = vmatprep.subr.bf16.mxu0 0
    %603 = vmatpush1.bf16.msra.mxu0 0
    %604 = vmatprep.subr.bf16.mxu0 0
    %605 = vmatpush1.bf16.msra.mxu0 0
    %606 = vmatprep.subr.bf16.mxu0 0
    %607 = vmatpush1.bf16.msra.mxu0 0
    %608 = vmatprep.subr.bf16.mxu0 0
    %609 = vmatpush1.bf16.msra.mxu0 0
    %610 = vmatprep.subr.bf16.mxu0 0
    %611 = vmatpush1.bf16.msra.mxu0 0
    %612 = vmatprep.subr.bf16.mxu0 0
    %613 = vmatpush1.bf16.msra.mxu0 0
    %614 = vmatprep.subr.bf16.mxu0 0
    %615 = vmatpush1.bf16.msra.mxu0 0
    %616 = vmatprep.subr.bf16.mxu0 0
    %617 = vmatpush1.bf16.msra.mxu0 0
    %618 = vmatprep.mubr.bf16.mxu0 0
    %619 = vmatmul.mubr.bf16.gmra.mrb[0].mxu0 %v96
    %v620 = vpop.f32.mrb[0].mxu0
    %v621 = vadd.f32 0.0, %v620
    %v622 = vpop.f32.mrb[0].mxu0
    %v623 = vadd.f32 0.0, %v622
    %v624 = vpop.f32.mrb[0].mxu0
    %v625 = vpop.f32.mrb[0].mxu0
    %626 = vdwg.mxu0
    %627 = vmatprep.subr.bf16.mxu0 %v422
    %628 = vmatpush1.bf16.msra.mxu0 %v421
    %629 = vmatprep.subr.bf16.mxu0 %v430
    %630 = vmatpush1.bf16.msra.mxu0 %v429
    %631 = vmatprep.subr.bf16.mxu0 %v438
    %632 = vmatpush1.bf16.msra.mxu0 %v437
    %633 = vmatprep.subr.bf16.mxu0 %v446
    %634 = vmatpush1.bf16.msra.mxu0 %v445
    %635 = vmatprep.subr.bf16.mxu0 %v454
    %636 = vmatpush1.bf16.msra.mxu0 %v453
    %637 = vmatprep.subr.bf16.mxu0 %v462
    %638 = vmatpush1.bf16.msra.mxu0 %v461
    %639 = vmatprep.subr.bf16.mxu0 %v470
    %640 = vmatpush1.bf16.msra.mxu0 %v469
    %641 = vmatprep.subr.bf16.mxu0 %v478
    %642 = vmatpush1.bf16.msra.mxu0 %v477
    %643 = vmatprep.subr.bf16.mxu0 0
    %644 = vmatpush1.bf16.msra.mxu0 0
    %645 = vmatprep.subr.bf16.mxu0 0
    %646 = vmatpush1.bf16.msra.mxu0 0
    %647 = vmatprep.subr.bf16.mxu0 0
    %648 = vmatpush1.bf16.msra.mxu0 0
    %649 = vmatprep.subr.bf16.mxu0 0
    %650 = vmatpush1.bf16.msra.mxu0 0
    %651 = vmatprep.subr.bf16.mxu0 0
    %652 = vmatpush1.bf16.msra.mxu0 0
    %653 = vmatprep.subr.bf16.mxu0 0
    %654 = vmatpush1.bf16.msra.mxu0 0
    %655 = vmatprep.subr.bf16.mxu0 0
    %656 = vmatpush1.bf16.msra.mxu0 0
    %657 = vmatprep.subr.bf16.mxu0 0
    %658 = vmatpush1.bf16.msra.mxu0 0
    %659 = vmatprep.mubr.bf16.mxu0 0
    %660 = vmatmul.mubr.bf16.gmra.mrb[0].mxu0 %v96
    %v661 = vpop.f32.mrb[0].mxu0
    %v662 = vadd.f32 0.0, %v661
    %v663 = vpop.f32.mrb[0].mxu0
    %v664 = vadd.f32 0.0, %v663
    %v665 = vpop.f32.mrb[0].mxu0
    %v666 = vpop.f32.mrb[0].mxu0
    %667 = vdwg.mxu0
    %668 = vmatprep.subr.bf16.mxu0 %v424
    %669 = vmatpush1.bf16.msra.mxu0 %v423
    %670 = vmatprep.subr.bf16.mxu0 %v432
    %671 = vmatpush1.bf16.msra.mxu0 %v431
    %672 = vmatprep.subr.bf16.mxu0 %v440
    %673 = vmatpush1.bf16.msra.mxu0 %v439
    %674 = vmatprep.subr.bf16.mxu0 %v448
    %675 = vmatpush1.bf16.msra.mxu0 %v447
    %676 = vmatprep.subr.bf16.mxu0 %v456
    %677 = vmatpush1.bf16.msra.mxu0 %v455
    %678 = vmatprep.subr.bf16.mxu0 %v464
    %679 = vmatpush1.bf16.msra.mxu0 %v463
    %680 = vmatprep.subr.bf16.mxu0 %v472
    %681 = vmatpush1.bf16.msra.mxu0 %v471
    %682 = vmatprep.subr.bf16.mxu0 %v480
    %683 = vmatpush1.bf16.msra.mxu0 %v479
    %684 = vmatprep.subr.bf16.mxu0 0
    %685 = vmatpush1.bf16.msra.mxu0 0
    %686 = vmatprep.subr.bf16.mxu0 0
    %687 = vmatpush1.bf16.msra.mxu0 0
    %688 = vmatprep.subr.bf16.mxu0 0
    %689 = vmatpush1.bf16.msra.mxu0 0
    %690 = vmatprep.subr.bf16.mxu0 0
    %691 = vmatpush1.bf16.msra.mxu0 0
    %692 = vmatprep.subr.bf16.mxu0 0
    %693 = vmatpush1.bf16.msra.mxu0 0
    %694 = vmatprep.subr.bf16.mxu0 0
    %695 = vmatpush1.bf16.msra.mxu0 0
    %696 = vmatprep.subr.bf16.mxu0 0
    %697 = vmatpush1.bf16.msra.mxu0 0
    %698 = vmatprep.subr.bf16.mxu0 0
    %699 = vmatpush1.bf16.msra.mxu0 0
    %700 = vmatprep.mubr.bf16.mxu0 0
    %701 = vmatmul.mubr.bf16.gmra.mrb[0].mxu0 %v96
    %v702 = vpop.f32.mrb[0].mxu0
    %v703 = vadd.f32 0.0, %v702
    %v704 = vpop.f32.mrb[0].mxu0
    %v705 = vadd.f32 0.0, %v704
    %v706 = vpop.f32.mrb[0].mxu0
    %v707 = vpop.f32.mrb[0].mxu0
    %708 = vdwg.mxu0
    %v773 = vunpack.c.l.b16 %v97
    %v774 = vunpack.c.h.b16 %v97
    %v775 = vunpack.c.l.b16 %v98
    %v776 = vunpack.c.h.b16 %v98
    %v777 = vunpack.c.l.b16 %v99
    %v778 = vunpack.c.h.b16 %v99
    %v779 = vunpack.c.l.b16 %v100
    %v780 = vunpack.c.h.b16 %v100
    %v781 = vunpack.c.l.b16 %v101
    %v782 = vunpack.c.h.b16 %v101
    %v783 = vunpack.c.l.b16 %v102
    %v784 = vunpack.c.h.b16 %v102
    %v785 = vunpack.c.l.b16 %v103
    %v786 = vunpack.c.h.b16 %v103
    %v787 = vunpack.c.l.b16 %v104
    %v788 = vunpack.c.h.b16 %v104
    %v789 = vunpack.c.l.b16 %v105
    %v790 = vunpack.c.h.b16 %v105
    %v791 = vunpack.c.l.b16 %v106
    %v792 = vunpack.c.h.b16 %v106
    %v793 = vunpack.c.l.b16 %v107
    %v794 = vunpack.c.h.b16 %v107
    %v795 = vunpack.c.l.b16 %v108
    %v796 = vunpack.c.h.b16 %v108
    %v797 = vunpack.c.l.b16 %v109
    %v798 = vunpack.c.h.b16 %v109
    %v799 = vunpack.c.l.b16 %v110
    %v800 = vunpack.c.h.b16 %v110
    %v801 = vunpack.c.l.b16 %v111
    %v802 = vunpack.c.h.b16 %v111
    %v803 = vunpack.c.l.b16 %v112
    %v804 = vunpack.c.h.b16 %v112
    %v805 = vunpack.c.l.b16 %v113
    %v806 = vunpack.c.h.b16 %v113
    %v807 = vunpack.c.l.b16 %v114
    %v808 = vunpack.c.h.b16 %v114
    %v809 = vunpack.c.l.b16 %v115
    %v810 = vunpack.c.h.b16 %v115
    %v811 = vunpack.c.l.b16 %v116
    %v812 = vunpack.c.h.b16 %v116
    %v813 = vunpack.c.l.b16 %v117
    %v814 = vunpack.c.h.b16 %v117
    %v815 = vunpack.c.l.b16 %v118
    %v816 = vunpack.c.h.b16 %v118
    %v817 = vunpack.c.l.b16 %v119
    %v818 = vunpack.c.h.b16 %v119
    %v819 = vunpack.c.l.b16 %v120
    %v820 = vunpack.c.h.b16 %v120
    %v821 = vunpack.c.l.b16 %v121
    %v822 = vunpack.c.h.b16 %v121
    %v823 = vunpack.c.l.b16 %v122
    %v824 = vunpack.c.h.b16 %v122
    %v825 = vunpack.c.l.b16 %v123
    %v826 = vunpack.c.h.b16 %v123
    %v827 = vunpack.c.l.b16 %v124
    %v828 = vunpack.c.h.b16 %v124
    %v829 = vunpack.c.l.b16 %v125
    %v830 = vunpack.c.h.b16 %v125
    %v831 = vunpack.c.l.b16 %v126
    %v832 = vunpack.c.h.b16 %v126
    %v833 = vunpack.c.l.b16 %v127
    %v834 = vunpack.c.h.b16 %v127
    %v835 = vunpack.c.l.b16 %v128
    %v836 = vunpack.c.h.b16 %v128
    %v837 = vunpack.c.l.b16 %v129
    %v838 = vunpack.c.h.b16 %v129
    %v839 = vunpack.c.l.b16 %v130
    %v840 = vunpack.c.h.b16 %v130
    %v841 = vunpack.c.l.b16 %v131
    %v842 = vunpack.c.h.b16 %v131
    %v843 = vunpack.c.l.b16 %v132
    %v844 = vunpack.c.h.b16 %v132
    %v845 = vunpack.c.l.b16 %v133
    %v846 = vunpack.c.h.b16 %v133
    %v847 = vunpack.c.l.b16 %v134
    %v848 = vunpack.c.h.b16 %v134
    %v849 = vunpack.c.l.b16 %v135
    %v850 = vunpack.c.h.b16 %v135
    %v851 = vunpack.c.l.b16 %v136
    %v852 = vunpack.c.h.b16 %v136
    %v853 = vunpack.c.l.b16 %v137
    %v854 = vunpack.c.h.b16 %v137
    %v855 = vunpack.c.l.b16 %v138
    %v856 = vunpack.c.h.b16 %v138
    %v857 = vunpack.c.l.b16 %v139
    %v858 = vunpack.c.h.b16 %v139
    %v859 = vunpack.c.l.b16 %v140
    %v860 = vunpack.c.h.b16 %v140
    %v861 = vunpack.c.l.b16 %v141
    %v862 = vunpack.c.h.b16 %v141
    %v863 = vunpack.c.l.b16 %v142
    %v864 = vunpack.c.h.b16 %v142
    %v865 = vunpack.c.l.b16 %v143
    %v866 = vunpack.c.h.b16 %v143
    %v867 = vunpack.c.l.b16 %v144
    %v868 = vunpack.c.h.b16 %v144
    %v869 = vunpack.c.l.b16 %v145
    %v870 = vunpack.c.h.b16 %v145
    %v871 = vunpack.c.l.b16 %v146
    %v872 = vunpack.c.h.b16 %v146
    %v873 = vunpack.c.l.b16 %v147
    %v874 = vunpack.c.h.b16 %v147
    %v875 = vunpack.c.l.b16 %v148
    %v876 = vunpack.c.h.b16 %v148
    %v877 = vunpack.c.l.b16 %v149
    %v878 = vunpack.c.h.b16 %v149
    %v879 = vunpack.c.l.b16 %v150
    %v880 = vunpack.c.h.b16 %v150
    %v881 = vunpack.c.l.b16 %v151
    %v882 = vunpack.c.h.b16 %v151
    %v883 = vunpack.c.l.b16 %v152
    %v884 = vunpack.c.h.b16 %v152
    %v885 = vunpack.c.l.b16 %v153
    %v886 = vunpack.c.h.b16 %v153
    %v887 = vunpack.c.l.b16 %v154
    %v888 = vunpack.c.h.b16 %v154
    %v889 = vunpack.c.l.b16 %v155
    %v890 = vunpack.c.h.b16 %v155
    %v891 = vunpack.c.l.b16 %v156
    %v892 = vunpack.c.h.b16 %v156
    %v893 = vunpack.c.l.b16 %v157
    %v894 = vunpack.c.h.b16 %v157
    %v895 = vunpack.c.l.b16 %v158
    %v896 = vunpack.c.h.b16 %v158
    %v897 = vunpack.c.l.b16 %v159
    %v898 = vunpack.c.h.b16 %v159
    %v899 = vunpack.c.l.b16 %v160
    %v900 = vunpack.c.h.b16 %v160
    %v901 = vpack.c.b16 %v781, %v773
    %v902 = vpack.c.b16 %v782, %v774
    %v903 = vpack.c.b16 %v783, %v775
    %v904 = vpack.c.b16 %v784, %v776
    %v905 = vpack.c.b16 %v785, %v777
    %v906 = vpack.c.b16 %v786, %v778
    %v907 = vpack.c.b16 %v787, %v779
    %v908 = vpack.c.b16 %v788, %v780
    %v909 = vpack.c.b16 %v797, %v789
    %v910 = vpack.c.b16 %v798, %v790
    %v911 = vpack.c.b16 %v799, %v791
    %v912 = vpack.c.b16 %v800, %v792
    %v913 = vpack.c.b16 %v801, %v793
    %v914 = vpack.c.b16 %v802, %v794
    %v915 = vpack.c.b16 %v803, %v795
    %v916 = vpack.c.b16 %v804, %v796
    %v917 = vpack.c.b16 %v813, %v805
    %v918 = vpack.c.b16 %v814, %v806
    %v919 = vpack.c.b16 %v815, %v807
    %v920 = vpack.c.b16 %v816, %v808
    %v921 = vpack.c.b16 %v817, %v809
    %v922 = vpack.c.b16 %v818, %v810
    %v923 = vpack.c.b16 %v819, %v811
    %v924 = vpack.c.b16 %v820, %v812
    %v925 = vpack.c.b16 %v829, %v821
    %v926 = vpack.c.b16 %v830, %v822
    %v927 = vpack.c.b16 %v831, %v823
    %v928 = vpack.c.b16 %v832, %v824
    %v929 = vpack.c.b16 %v833, %v825
    %v930 = vpack.c.b16 %v834, %v826
    %v931 = vpack.c.b16 %v835, %v827
    %v932 = vpack.c.b16 %v836, %v828
    %v933 = vpack.c.b16 %v845, %v837
    %v934 = vpack.c.b16 %v846, %v838
    %v935 = vpack.c.b16 %v847, %v839
    %v936 = vpack.c.b16 %v848, %v840
    %v937 = vpack.c.b16 %v849, %v841
    %v938 = vpack.c.b16 %v850, %v842
    %v939 = vpack.c.b16 %v851, %v843
    %v940 = vpack.c.b16 %v852, %v844
    %v941 = vpack.c.b16 %v861, %v853
    %v942 = vpack.c.b16 %v862, %v854
    %v943 = vpack.c.b16 %v863, %v855
    %v944 = vpack.c.b16 %v864, %v856
    %v945 = vpack.c.b16 %v865, %v857
    %v946 = vpack.c.b16 %v866, %v858
    %v947 = vpack.c.b16 %v867, %v859
    %v948 = vpack.c.b16 %v868, %v860
    %v949 = vpack.c.b16 %v877, %v869
    %v950 = vpack.c.b16 %v878, %v870
    %v951 = vpack.c.b16 %v879, %v871
    %v952 = vpack.c.b16 %v880, %v872
    %v953 = vpack.c.b16 %v881, %v873
    %v954 = vpack.c.b16 %v882, %v874
    %v955 = vpack.c.b16 %v883, %v875
    %v956 = vpack.c.b16 %v884, %v876
    %v957 = vpack.c.b16 %v893, %v885
    %v958 = vpack.c.b16 %v894, %v886
    %v959 = vpack.c.b16 %v895, %v887
    %v960 = vpack.c.b16 %v896, %v888
    %v961 = vpack.c.b16 %v897, %v889
    %v962 = vpack.c.b16 %v898, %v890
    %v963 = vpack.c.b16 %v899, %v891
    %v964 = vpack.c.b16 %v900, %v892
    %1029 = vmatprep.subr.bf16.mxu0 %v902
    %1030 = vmatpush1.bf16.msra.mxu0 %v901
    %1031 = vmatprep.subr.bf16.mxu0 %v910
    %1032 = vmatpush1.bf16.msra.mxu0 %v909
    %1033 = vmatprep.subr.bf16.mxu0 %v918
    %1034 = vmatpush1.bf16.msra.mxu0 %v917
    %1035 = vmatprep.subr.bf16.mxu0 %v926
    %1036 = vmatpush1.bf16.msra.mxu0 %v925
    %1037 = vmatprep.subr.bf16.mxu0 %v934
    %1038 = vmatpush1.bf16.msra.mxu0 %v933
    %1039 = vmatprep.subr.bf16.mxu0 %v942
    %1040 = vmatpush1.bf16.msra.mxu0 %v941
    %1041 = vmatprep.subr.bf16.mxu0 %v950
    %1042 = vmatpush1.bf16.msra.mxu0 %v949
    %1043 = vmatprep.subr.bf16.mxu0 %v958
    %1044 = vmatpush1.bf16.msra.mxu0 %v957
    %1045 = vmatprep.subr.bf16.mxu0 0
    %1046 = vmatpush1.bf16.msra.mxu0 0
    %1047 = vmatprep.subr.bf16.mxu0 0
    %1048 = vmatpush1.bf16.msra.mxu0 0
    %1049 = vmatprep.subr.bf16.mxu0 0
    %1050 = vmatpush1.bf16.msra.mxu0 0
    %1051 = vmatprep.subr.bf16.mxu0 0
    %1052 = vmatpush1.bf16.msra.mxu0 0
    %1053 = vmatprep.subr.bf16.mxu0 0
    %1054 = vmatpush1.bf16.msra.mxu0 0
    %1055 = vmatprep.subr.bf16.mxu0 0
    %1056 = vmatpush1.bf16.msra.mxu0 0
    %1057 = vmatprep.subr.bf16.mxu0 0
    %1058 = vmatpush1.bf16.msra.mxu0 0
    %1059 = vmatprep.subr.bf16.mxu0 0
    %1060 = vmatpush1.bf16.msra.mxu0 0
    %1061 = vmatprep.mubr.bf16.mxu0 0
    %1062 = vmatmul.mubr.bf16.gmra.mrb[0].mxu0 %v95
    %v1063 = vpop.f32.mrb[0].mxu0
    %v1064 = vadd.f32 %v580, %v1063
    %v1065 = vpop.f32.mrb[0].mxu0
    %v1066 = vadd.f32 %v582, %v1065
    %v1067 = vpop.f32.mrb[0].mxu0
    %v1068 = vpop.f32.mrb[0].mxu0
    %1069 = vdwg.mxu0
    %1070 = vmatprep.subr.bf16.mxu0 %v904
    %1071 = vmatpush1.bf16.msra.mxu0 %v903
    %1072 = vmatprep.subr.bf16.mxu0 %v912
    %1073 = vmatpush1.bf16.msra.mxu0 %v911
    %1074 = vmatprep.subr.bf16.mxu0 %v920
    %1075 = vmatpush1.bf16.msra.mxu0 %v919
    %1076 = vmatprep.subr.bf16.mxu0 %v928
    %1077 = vmatpush1.bf16.msra.mxu0 %v927
    %1078 = vmatprep.subr.bf16.mxu0 %v936
    %1079 = vmatpush1.bf16.msra.mxu0 %v935
    %1080 = vmatprep.subr.bf16.mxu0 %v944
    %1081 = vmatpush1.bf16.msra.mxu0 %v943
    %1082 = vmatprep.subr.bf16.mxu0 %v952
    %1083 = vmatpush1.bf16.msra.mxu0 %v951
    %1084 = vmatprep.subr.bf16.mxu0 %v960
    %1085 = vmatpush1.bf16.msra.mxu0 %v959
    %1086 = vmatprep.subr.bf16.mxu0 0
    %1087 = vmatpush1.bf16.msra.mxu0 0
    %1088 = vmatprep.subr.bf16.mxu0 0
    %1089 = vmatpush1.bf16.msra.mxu0 0
    %1090 = vmatprep.subr.bf16.mxu0 0
    %1091 = vmatpush1.bf16.msra.mxu0 0
    %1092 = vmatprep.subr.bf16.mxu0 0
    %1093 = vmatpush1.bf16.msra.mxu0 0
    %1094 = vmatprep.subr.bf16.mxu0 0
    %1095 = vmatpush1.bf16.msra.mxu0 0
    %1096 = vmatprep.subr.bf16.mxu0 0
    %1097 = vmatpush1.bf16.msra.mxu0 0
    %1098 = vmatprep.subr.bf16.mxu0 0
    %1099 = vmatpush1.bf16.msra.mxu0 0
    %1100 = vmatprep.subr.bf16.mxu0 0
    %1101 = vmatpush1.bf16.msra.mxu0 0
    %1102 = vmatprep.mubr.bf16.mxu0 0
    %1103 = vmatmul.mubr.bf16.gmra.mrb[0].mxu0 %v95
    %v1104 = vpop.f32.mrb[0].mxu0
    %v1105 = vadd.f32 %v621, %v1104
    %v1106 = vpop.f32.mrb[0].mxu0
    %v1107 = vadd.f32 %v623, %v1106
    %v1108 = vpop.f32.mrb[0].mxu0
    %v1109 = vpop.f32.mrb[0].mxu0
    %1110 = vdwg.mxu0
    %1111 = vmatprep.subr.bf16.mxu0 %v906
    %1112 = vmatpush1.bf16.msra.mxu0 %v905
    %1113 = vmatprep.subr.bf16.mxu0 %v914
    %1114 = vmatpush1.bf16.msra.mxu0 %v913
    %1115 = vmatprep.subr.bf16.mxu0 %v922
    %1116 = vmatpush1.bf16.msra.mxu0 %v921
    %1117 = vmatprep.subr.bf16.mxu0 %v930
    %1118 = vmatpush1.bf16.msra.mxu0 %v929
    %1119 = vmatprep.subr.bf16.mxu0 %v938
    %1120 = vmatpush1.bf16.msra.mxu0 %v937
    %1121 = vmatprep.subr.bf16.mxu0 %v946
    %1122 = vmatpush1.bf16.msra.mxu0 %v945
    %1123 = vmatprep.subr.bf16.mxu0 %v954
    %1124 = vmatpush1.bf16.msra.mxu0 %v953
    %1125 = vmatprep.subr.bf16.mxu0 %v962
    %1126 = vmatpush1.bf16.msra.mxu0 %v961
    %1127 = vmatprep.subr.bf16.mxu0 0
    %1128 = vmatpush1.bf16.msra.mxu0 0
    %1129 = vmatprep.subr.bf16.mxu0 0
    %1130 = vmatpush1.bf16.msra.mxu0 0
    %1131 = vmatprep.subr.bf16.mxu0 0
    %1132 = vmatpush1.bf16.msra.mxu0 0
    %1133 = vmatprep.subr.bf16.mxu0 0
    %1134 = vmatpush1.bf16.msra.mxu0 0
    %1135 = vmatprep.subr.bf16.mxu0 0
    %1136 = vmatpush1.bf16.msra.mxu0 0
    %1137 = vmatprep.subr.bf16.mxu0 0
    %1138 = vmatpush1.bf16.msra.mxu0 0
    %1139 = vmatprep.subr.bf16.mxu0 0
    %1140 = vmatpush1.bf16.msra.mxu0 0
    %1141 = vmatprep.subr.bf16.mxu0 0
    %1142 = vmatpush1.bf16.msra.mxu0 0
    %1143 = vmatprep.mubr.bf16.mxu0 0
    %1144 = vmatmul.mubr.bf16.gmra.mrb[0].mxu0 %v95
    %v1145 = vpop.f32.mrb[0].mxu0
    %v1146 = vadd.f32 %v662, %v1145
    %v1147 = vpop.f32.mrb[0].mxu0
    %v1148 = vadd.f32 %v664, %v1147
    %v1149 = vpop.f32.mrb[0].mxu0
    %v1150 = vpop.f32.mrb[0].mxu0
    %1151 = vdwg.mxu0
    %1152 = vmatprep.subr.bf16.mxu0 %v908
    %1153 = vmatpush1.bf16.msra.mxu0 %v907
    %1154 = vmatprep.subr.bf16.mxu0 %v916
    %1155 = vmatpush1.bf16.msra.mxu0 %v915
    %1156 = vmatprep.subr.bf16.mxu0 %v924
    %1157 = vmatpush1.bf16.msra.mxu0 %v923
    %1158 = vmatprep.subr.bf16.mxu0 %v932
    %1159 = vmatpush1.bf16.msra.mxu0 %v931
    %1160 = vmatprep.subr.bf16.mxu0 %v940
    %1161 = vmatpush1.bf16.msra.mxu0 %v939
    %1162 = vmatprep.subr.bf16.mxu0 %v948
    %1163 = vmatpush1.bf16.msra.mxu0 %v947
    %1164 = vmatprep.subr.bf16.mxu0 %v956
    %1165 = vmatpush1.bf16.msra.mxu0 %v955
    %1166 = vmatprep.subr.bf16.mxu0 %v964
    %1167 = vmatpush1.bf16.msra.mxu0 %v963
    %1168 = vmatprep.subr.bf16.mxu0 0
    %1169 = vmatpush1.bf16.msra.mxu0 0
    %1170 = vmatprep.subr.bf16.mxu0 0
    %1171 = vmatpush1.bf16.msra.mxu0 0
    %1172 = vmatprep.subr.bf16.mxu0 0
    %1173 = vmatpush1.bf16.msra.mxu0 0
    %1174 = vmatprep.subr.bf16.mxu0 0
    %1175 = vmatpush1.bf16.msra.mxu0 0
    %1176 = vmatprep.subr.bf16.mxu0 0
    %1177 = vmatpush1.bf16.msra.mxu0 0
    %1178 = vmatprep.subr.bf16.mxu0 0
    %1179 = vmatpush1.bf16.msra.mxu0 0
    %1180 = vmatprep.subr.bf16.mxu0 0
    %1181 = vmatpush1.bf16.msra.mxu0 0
    %1182 = vmatprep.subr.bf16.mxu0 0
    %1183 = vmatpush1.bf16.msra.mxu0 0
    %1184 = vmatprep.mubr.bf16.mxu0 0
    %1185 = vmatmul.mubr.bf16.gmra.mrb[0].mxu0 %v95
    %v1186 = vpop.f32.mrb[0].mxu0
    %v1187 = vadd.f32 %v703, %v1186
    %v1188 = vpop.f32.mrb[0].mxu0
    %v1189 = vadd.f32 %v705, %v1188
    %v1190 = vpop.f32.mrb[0].mxu0
    %v1191 = vpop.f32.mrb[0].mxu0
    %1192 = vdwg.mxu0
    %v1193 = vld [vmem:[%s3] sm:$0xff]
    %v1195 = vlaneseq
    %v1196 = vshrl.u32 %v1195, 7
    %v1197 = vsub.s32 0, %v1196
    %v1198 = vrot.slane %v1193, %v1197
    %v1199 = vlaneseq
    %v1200 = vshrl.u32 %v1199, 7
    %v1201 = vsub.s32 1, %v1200
    %v1202 = vrot.slane %v1193, %v1201
    %v1203 = vlaneseq
    %v1204 = vshrl.u32 %v1203, 7
    %v1205 = vsub.s32 2, %v1204
    %v1206 = vrot.slane %v1193, %v1205
    %v1207 = vlaneseq
    %v1208 = vshrl.u32 %v1207, 7
    %v1209 = vsub.s32 3, %v1208
    %v1210 = vrot.slane %v1193, %v1209
    %v1211 = vlaneseq
    %v1212 = vshrl.u32 %v1211, 7
    %v1213 = vsub.s32 4, %v1212
    %v1214 = vrot.slane %v1193, %v1213
    %v1215 = vlaneseq
    %v1216 = vshrl.u32 %v1215, 7
    %v1217 = vsub.s32 5, %v1216
    %v1218 = vrot.slane %v1193, %v1217
    %v1219 = vlaneseq
    %v1220 = vshrl.u32 %v1219, 7
    %v1221 = vsub.s32 6, %v1220
    %v1222 = vrot.slane %v1193, %v1221
    %v1223 = vlaneseq
    %v1224 = vshrl.u32 %v1223, 7
    %v1225 = vsub.s32 7, %v1224
    %v1226 = vrot.slane %v1193, %v1225
    %v1235 = vadd.f32 %v1064, %v1198
    %v1236 = vadd.f32 %v1066, %v1202
    %v1237 = vadd.f32 %v1105, %v1206
    %v1238 = vadd.f32 %v1107, %v1210
    %v1239 = vadd.f32 %v1146, %v1214
    %v1240 = vadd.f32 %v1148, %v1218
    %v1241 = vadd.f32 %v1187, %v1222
    %v1242 = vadd.f32 %v1189, %v1226
    %v1243 = vmax.f32 %v1235, 0.0
    %v1244 = vmax.f32 %v1236, 0.0
    %v1245 = vmax.f32 %v1237, 0.0
    %v1246 = vmax.f32 %v1238, 0.0
    %v1247 = vmax.f32 %v1239, 0.0
    %v1248 = vmax.f32 %v1240, 0.0
    %v1249 = vmax.f32 %v1241, 0.0
    %v1250 = vmax.f32 %v1242, 0.0
    %v1251 = vpack.c.bf16 %v1243, %v1243
    %v1252 = vpack.c.bf16 %v1244, %v1244
    %v1253 = vpack.c.bf16 %v1245, %v1245
    %v1254 = vpack.c.bf16 %v1246, %v1246
    %v1255 = vpack.c.bf16 %v1247, %v1247
    %v1256 = vpack.c.bf16 %v1248, %v1248
    %v1257 = vpack.c.bf16 %v1249, %v1249
    %v1258 = vpack.c.bf16 %v1250, %v1250
    %v1259 = vld [vmem:[#allocation8] sm:$0xff]
    %v1260 = vld [vmem:[#allocation8 + $0x8] sm:$0xff]
    %v1261 = vld [vmem:[#allocation8 + $0x10] sm:$0xff]
    %v1262 = vld [vmem:[#allocation8 + $0x18] sm:$0xff]
    %v1263 = vld [vmem:[#allocation8 + $0x20] sm:$0xff]
    %v1264 = vld [vmem:[#allocation8 + $0x28] sm:$0xff]
    %v1265 = vld [vmem:[#allocation8 + $0x30] sm:$0xff]
    %v1266 = vld [vmem:[#allocation8 + $0x38] sm:$0xff]
    %v1267 = vld [vmem:[#allocation8 + $0x40] sm:$0xff]
    %v1268 = vld [vmem:[#allocation8 + $0x48] sm:$0xff]
    %v1269 = vld [vmem:[#allocation8 + $0x50] sm:$0xff]
    %v1270 = vld [vmem:[#allocation8 + $0x58] sm:$0xff]
    %v1271 = vld [vmem:[#allocation8 + $0x60] sm:$0xff]
    %v1272 = vld [vmem:[#allocation8 + $0x68] sm:$0xff]
    %v1273 = vld [vmem:[#allocation8 + $0x70] sm:$0xff]
    %v1274 = vld [vmem:[#allocation8 + $0x78] sm:$0xff]
    %v1275 = vld [vmem:[#allocation8 + $0x80] sm:$0xff]
    %v1276 = vld [vmem:[#allocation8 + $0x88] sm:$0xff]
    %v1277 = vld [vmem:[#allocation8 + $0x90] sm:$0xff]
    %v1278 = vld [vmem:[#allocation8 + $0x98] sm:$0xff]
    %v1279 = vld [vmem:[#allocation8 + $0xa0] sm:$0xff]
    %v1280 = vld [vmem:[#allocation8 + $0xa8] sm:$0xff]
    %v1281 = vld [vmem:[#allocation8 + $0xb0] sm:$0xff]
    %v1282 = vld [vmem:[#allocation8 + $0xb8] sm:$0xff]
    %v1283 = vld [vmem:[#allocation8 + $0xc0] sm:$0xff]
    %v1284 = vld [vmem:[#allocation8 + $0xc8] sm:$0xff]
    %v1285 = vld [vmem:[#allocation8 + $0xd0] sm:$0xff]
    %v1286 = vld [vmem:[#allocation8 + $0xd8] sm:$0xff]
    %v1287 = vld [vmem:[#allocation8 + $0xe0] sm:$0xff]
    %v1288 = vld [vmem:[#allocation8 + $0xe8] sm:$0xff]
    %v1289 = vld [vmem:[#allocation8 + $0xf0] sm:$0xff]
    %v1290 = vld [vmem:[#allocation8 + $0xf8] sm:$0xff]
    %v1291 = vld [vmem:[#allocation8 + $0x100] sm:$0xff]
    %v1292 = vld [vmem:[#allocation8 + $0x108] sm:$0xff]
    %v1293 = vld [vmem:[#allocation8 + $0x110] sm:$0xff]
    %v1294 = vld [vmem:[#allocation8 + $0x118] sm:$0xff]
    %v1295 = vld [vmem:[#allocation8 + $0x120] sm:$0xff]
    %v1296 = vld [vmem:[#allocation8 + $0x128] sm:$0xff]
    %v1297 = vld [vmem:[#allocation8 + $0x130] sm:$0xff]
    %v1298 = vld [vmem:[#allocation8 + $0x138] sm:$0xff]
    %v1299 = vld [vmem:[#allocation8 + $0x140] sm:$0xff]
    %v1300 = vld [vmem:[#allocation8 + $0x148] sm:$0xff]
    %v1301 = vld [vmem:[#allocation8 + $0x150] sm:$0xff]
    %v1302 = vld [vmem:[#allocation8 + $0x158] sm:$0xff]
    %v1303 = vld [vmem:[#allocation8 + $0x160] sm:$0xff]
    %v1304 = vld [vmem:[#allocation8 + $0x168] sm:$0xff]
    %v1305 = vld [vmem:[#allocation8 + $0x170] sm:$0xff]
    %v1306 = vld [vmem:[#allocation8 + $0x178] sm:$0xff]
    %v1307 = vld [vmem:[#allocation8 + $0x180] sm:$0xff]
    %v1308 = vld [vmem:[#allocation8 + $0x188] sm:$0xff]
    %v1309 = vld [vmem:[#allocation8 + $0x190] sm:$0xff]
    %v1310 = vld [vmem:[#allocation8 + $0x198] sm:$0xff]
    %v1311 = vld [vmem:[#allocation8 + $0x1a0] sm:$0xff]
    %v1312 = vld [vmem:[#allocation8 + $0x1a8] sm:$0xff]
    %v1313 = vld [vmem:[#allocation8 + $0x1b0] sm:$0xff]
    %v1314 = vld [vmem:[#allocation8 + $0x1b8] sm:$0xff]
    %v1315 = vld [vmem:[#allocation8 + $0x1c0] sm:$0xff]
    %v1316 = vld [vmem:[#allocation8 + $0x1c8] sm:$0xff]
    %v1317 = vld [vmem:[#allocation8 + $0x1d0] sm:$0xff]
    %v1318 = vld [vmem:[#allocation8 + $0x1d8] sm:$0xff]
    %v1319 = vld [vmem:[#allocation8 + $0x1e0] sm:$0xff]
    %v1320 = vld [vmem:[#allocation8 + $0x1e8] sm:$0xff]
    %v1321 = vld [vmem:[#allocation8 + $0x1f0] sm:$0xff]
    %v1322 = vld [vmem:[#allocation8 + $0x1f8] sm:$0xff]
    %v1323 = vld [vmem:[#allocation8 + $0x200] sm:$0xff]
    %v1324 = vld [vmem:[#allocation8 + $0x208] sm:$0xff]
    %v1325 = vld [vmem:[#allocation8 + $0x210] sm:$0xff]
    %v1326 = vld [vmem:[#allocation8 + $0x218] sm:$0xff]
    %v1327 = vld [vmem:[#allocation8 + $0x220] sm:$0xff]
    %v1328 = vld [vmem:[#allocation8 + $0x228] sm:$0xff]
    %v1329 = vld [vmem:[#allocation8 + $0x230] sm:$0xff]
    %v1330 = vld [vmem:[#allocation8 + $0x238] sm:$0xff]
    %v1331 = vld [vmem:[#allocation8 + $0x240] sm:$0xff]
    %v1332 = vld [vmem:[#allocation8 + $0x248] sm:$0xff]
    %v1333 = vld [vmem:[#allocation8 + $0x250] sm:$0xff]
    %v1334 = vld [vmem:[#allocation8 + $0x258] sm:$0xff]
    %v1335 = vld [vmem:[#allocation8 + $0x260] sm:$0xff]
    %v1336 = vld [vmem:[#allocation8 + $0x268] sm:$0xff]
    %v1337 = vld [vmem:[#allocation8 + $0x270] sm:$0xff]
    %v1338 = vld [vmem:[#allocation8 + $0x278] sm:$0xff]
    %v1339 = vld [vmem:[#allocation8 + $0x280] sm:$0xff]
    %v1340 = vld [vmem:[#allocation8 + $0x288] sm:$0xff]
    %v1341 = vld [vmem:[#allocation8 + $0x290] sm:$0xff]
    %v1342 = vld [vmem:[#allocation8 + $0x298] sm:$0xff]
    %v1343 = vld [vmem:[#allocation8 + $0x2a0] sm:$0xff]
    %v1344 = vld [vmem:[#allocation8 + $0x2a8] sm:$0xff]
    %v1345 = vld [vmem:[#allocation8 + $0x2b0] sm:$0xff]
    %v1346 = vld [vmem:[#allocation8 + $0x2b8] sm:$0xff]
    %v1347 = vld [vmem:[#allocation8 + $0x2c0] sm:$0xff]
    %v1348 = vld [vmem:[#allocation8 + $0x2c8] sm:$0xff]
    %v1349 = vld [vmem:[#allocation8 + $0x2d0] sm:$0xff]
    %v1350 = vld [vmem:[#allocation8 + $0x2d8] sm:$0xff]
    %v1351 = vld [vmem:[#allocation8 + $0x2e0] sm:$0xff]
    %v1352 = vld [vmem:[#allocation8 + $0x2e8] sm:$0xff]
    %v1353 = vld [vmem:[#allocation8 + $0x2f0] sm:$0xff]
    %v1354 = vld [vmem:[#allocation8 + $0x2f8] sm:$0xff]
    %v1355 = vld [vmem:[#allocation8 + $0x300] sm:$0xff]
    %v1356 = vld [vmem:[#allocation8 + $0x308] sm:$0xff]
    %v1357 = vld [vmem:[#allocation8 + $0x310] sm:$0xff]
    %v1358 = vld [vmem:[#allocation8 + $0x318] sm:$0xff]
    %v1359 = vld [vmem:[#allocation8 + $0x320] sm:$0xff]
    %v1360 = vld [vmem:[#allocation8 + $0x328] sm:$0xff]
    %v1361 = vld [vmem:[#allocation8 + $0x330] sm:$0xff]
    %v1362 = vld [vmem:[#allocation8 + $0x338] sm:$0xff]
    %v1363 = vld [vmem:[#allocation8 + $0x340] sm:$0xff]
    %v1364 = vld [vmem:[#allocation8 + $0x348] sm:$0xff]
    %v1365 = vld [vmem:[#allocation8 + $0x350] sm:$0xff]
    %v1366 = vld [vmem:[#allocation8 + $0x358] sm:$0xff]
    %v1367 = vld [vmem:[#allocation8 + $0x360] sm:$0xff]
    %v1368 = vld [vmem:[#allocation8 + $0x368] sm:$0xff]
    %v1369 = vld [vmem:[#allocation8 + $0x370] sm:$0xff]
    %v1370 = vld [vmem:[#allocation8 + $0x378] sm:$0xff]
    %v1371 = vld [vmem:[#allocation8 + $0x380] sm:$0xff]
    %v1372 = vld [vmem:[#allocation8 + $0x388] sm:$0xff]
    %v1373 = vld [vmem:[#allocation8 + $0x390] sm:$0xff]
    %v1374 = vld [vmem:[#allocation8 + $0x398] sm:$0xff]
    %v1375 = vld [vmem:[#allocation8 + $0x3a0] sm:$0xff]
    %v1376 = vld [vmem:[#allocation8 + $0x3a8] sm:$0xff]
    %v1377 = vld [vmem:[#allocation8 + $0x3b0] sm:$0xff]
    %v1378 = vld [vmem:[#allocation8 + $0x3b8] sm:$0xff]
    %v1379 = vld [vmem:[#allocation8 + $0x3c0] sm:$0xff]
    %v1380 = vld [vmem:[#allocation8 + $0x3c8] sm:$0xff]
    %v1381 = vld [vmem:[#allocation8 + $0x3d0] sm:$0xff]
    %v1382 = vld [vmem:[#allocation8 + $0x3d8] sm:$0xff]
    %v1383 = vld [vmem:[#allocation8 + $0x3e0] sm:$0xff]
    %v1384 = vld [vmem:[#allocation8 + $0x3e8] sm:$0xff]
    %v1385 = vld [vmem:[#allocation8 + $0x3f0] sm:$0xff]
    %v1386 = vld [vmem:[#allocation8 + $0x3f8] sm:$0xff]
    %v1387 = vld [vmem:[#allocation8 + $0x400] sm:$0xff]
    %v1388 = vld [vmem:[#allocation8 + $0x408] sm:$0xff]
    %v1389 = vld [vmem:[#allocation8 + $0x410] sm:$0xff]
    %v1390 = vld [vmem:[#allocation8 + $0x418] sm:$0xff]
    %v1391 = vld [vmem:[#allocation8 + $0x420] sm:$0xff]
    %v1392 = vld [vmem:[#allocation8 + $0x428] sm:$0xff]
    %v1393 = vld [vmem:[#allocation8 + $0x430] sm:$0xff]
    %v1394 = vld [vmem:[#allocation8 + $0x438] sm:$0xff]
    %v1395 = vld [vmem:[#allocation8 + $0x440] sm:$0xff]
    %v1396 = vld [vmem:[#allocation8 + $0x448] sm:$0xff]
    %v1397 = vld [vmem:[#allocation8 + $0x450] sm:$0xff]
    %v1398 = vld [vmem:[#allocation8 + $0x458] sm:$0xff]
    %v1399 = vld [vmem:[#allocation8 + $0x460] sm:$0xff]
    %v1400 = vld [vmem:[#allocation8 + $0x468] sm:$0xff]
    %v1401 = vld [vmem:[#allocation8 + $0x470] sm:$0xff]
    %v1402 = vld [vmem:[#allocation8 + $0x478] sm:$0xff]
    %v1403 = vld [vmem:[#allocation8 + $0x480] sm:$0xff]
    %v1404 = vld [vmem:[#allocation8 + $0x488] sm:$0xff]
    %v1405 = vld [vmem:[#allocation8 + $0x490] sm:$0xff]
    %v1406 = vld [vmem:[#allocation8 + $0x498] sm:$0xff]
    %v1407 = vld [vmem:[#allocation8 + $0x4a0] sm:$0xff]
    %v1408 = vld [vmem:[#allocation8 + $0x4a8] sm:$0xff]
    %v1409 = vld [vmem:[#allocation8 + $0x4b0] sm:$0xff]
    %v1410 = vld [vmem:[#allocation8 + $0x4b8] sm:$0xff]
    %v1411 = vld [vmem:[#allocation8 + $0x4c0] sm:$0xff]
    %v1412 = vld [vmem:[#allocation8 + $0x4c8] sm:$0xff]
    %v1413 = vld [vmem:[#allocation8 + $0x4d0] sm:$0xff]
    %v1414 = vld [vmem:[#allocation8 + $0x4d8] sm:$0xff]
    %v1415 = vld [vmem:[#allocation8 + $0x4e0] sm:$0xff]
    %v1416 = vld [vmem:[#allocation8 + $0x4e8] sm:$0xff]
    %v1417 = vld [vmem:[#allocation8 + $0x4f0] sm:$0xff]
    %v1418 = vld [vmem:[#allocation8 + $0x4f8] sm:$0xff]
    %v1419 = vld [vmem:[#allocation8 + $0x500] sm:$0xff]
    %v1420 = vld [vmem:[#allocation8 + $0x508] sm:$0xff]
    %v1421 = vld [vmem:[#allocation8 + $0x510] sm:$0xff]
    %v1422 = vld [vmem:[#allocation8 + $0x518] sm:$0xff]
    %v1423 = vld [vmem:[#allocation8 + $0x520] sm:$0xff]
    %v1424 = vld [vmem:[#allocation8 + $0x528] sm:$0xff]
    %v1425 = vld [vmem:[#allocation8 + $0x530] sm:$0xff]
    %v1426 = vld [vmem:[#allocation8 + $0x538] sm:$0xff]
    %v1427 = vld [vmem:[#allocation8 + $0x540] sm:$0xff]
    %v1428 = vld [vmem:[#allocation8 + $0x548] sm:$0xff]
    %v1429 = vld [vmem:[#allocation8 + $0x550] sm:$0xff]
    %v1430 = vld [vmem:[#allocation8 + $0x558] sm:$0xff]
    %v1431 = vld [vmem:[#allocation8 + $0x560] sm:$0xff]
    %v1432 = vld [vmem:[#allocation8 + $0x568] sm:$0xff]
    %v1433 = vld [vmem:[#allocation8 + $0x570] sm:$0xff]
    %v1434 = vld [vmem:[#allocation8 + $0x578] sm:$0xff]
    %v1435 = vld [vmem:[#allocation8 + $0x580] sm:$0xff]
    %v1436 = vld [vmem:[#allocation8 + $0x588] sm:$0xff]
    %v1437 = vld [vmem:[#allocation8 + $0x590] sm:$0xff]
    %v1438 = vld [vmem:[#allocation8 + $0x598] sm:$0xff]
    %v1439 = vld [vmem:[#allocation8 + $0x5a0] sm:$0xff]
    %v1440 = vld [vmem:[#allocation8 + $0x5a8] sm:$0xff]
    %v1441 = vld [vmem:[#allocation8 + $0x5b0] sm:$0xff]
    %v1442 = vld [vmem:[#allocation8 + $0x5b8] sm:$0xff]
    %v1443 = vld [vmem:[#allocation8 + $0x5c0] sm:$0xff]
    %v1444 = vld [vmem:[#allocation8 + $0x5c8] sm:$0xff]
    %v1445 = vld [vmem:[#allocation8 + $0x5d0] sm:$0xff]
    %v1446 = vld [vmem:[#allocation8 + $0x5d8] sm:$0xff]
    %v1447 = vld [vmem:[#allocation8 + $0x5e0] sm:$0xff]
    %v1448 = vld [vmem:[#allocation8 + $0x5e8] sm:$0xff]
    %v1449 = vld [vmem:[#allocation8 + $0x5f0] sm:$0xff]
    %v1450 = vld [vmem:[#allocation8 + $0x5f8] sm:$0xff]
    %v1451 = vld [vmem:[#allocation8 + $0x600] sm:$0xff]
    %v1452 = vld [vmem:[#allocation8 + $0x608] sm:$0xff]
    %v1453 = vld [vmem:[#allocation8 + $0x610] sm:$0xff]
    %v1454 = vld [vmem:[#allocation8 + $0x618] sm:$0xff]
    %v1455 = vld [vmem:[#allocation8 + $0x620] sm:$0xff]
    %v1456 = vld [vmem:[#allocation8 + $0x628] sm:$0xff]
    %v1457 = vld [vmem:[#allocation8 + $0x630] sm:$0xff]
    %v1458 = vld [vmem:[#allocation8 + $0x638] sm:$0xff]
    %v1459 = vld [vmem:[#allocation8 + $0x640] sm:$0xff]
    %v1460 = vld [vmem:[#allocation8 + $0x648] sm:$0xff]
    %v1461 = vld [vmem:[#allocation8 + $0x650] sm:$0xff]
    %v1462 = vld [vmem:[#allocation8 + $0x658] sm:$0xff]
    %v1463 = vld [vmem:[#allocation8 + $0x660] sm:$0xff]
    %v1464 = vld [vmem:[#allocation8 + $0x668] sm:$0xff]
    %v1465 = vld [vmem:[#allocation8 + $0x670] sm:$0xff]
    %v1466 = vld [vmem:[#allocation8 + $0x678] sm:$0xff]
    %v1467 = vld [vmem:[#allocation8 + $0x680] sm:$0xff]
    %v1468 = vld [vmem:[#allocation8 + $0x688] sm:$0xff]
    %v1469 = vld [vmem:[#allocation8 + $0x690] sm:$0xff]
    %v1470 = vld [vmem:[#allocation8 + $0x698] sm:$0xff]
    %v1471 = vld [vmem:[#allocation8 + $0x6a0] sm:$0xff]
    %v1472 = vld [vmem:[#allocation8 + $0x6a8] sm:$0xff]
    %v1473 = vld [vmem:[#allocation8 + $0x6b0] sm:$0xff]
    %v1474 = vld [vmem:[#allocation8 + $0x6b8] sm:$0xff]
    %v1475 = vld [vmem:[#allocation8 + $0x6c0] sm:$0xff]
    %v1476 = vld [vmem:[#allocation8 + $0x6c8] sm:$0xff]
    %v1477 = vld [vmem:[#allocation8 + $0x6d0] sm:$0xff]
    %v1478 = vld [vmem:[#allocation8 + $0x6d8] sm:$0xff]
    %v1479 = vld [vmem:[#allocation8 + $0x6e0] sm:$0xff]
    %v1480 = vld [vmem:[#allocation8 + $0x6e8] sm:$0xff]
    %v1481 = vld [vmem:[#allocation8 + $0x6f0] sm:$0xff]
    %v1482 = vld [vmem:[#allocation8 + $0x6f8] sm:$0xff]
    %v1483 = vld [vmem:[#allocation8 + $0x700] sm:$0xff]
    %v1484 = vld [vmem:[#allocation8 + $0x708] sm:$0xff]
    %v1485 = vld [vmem:[#allocation8 + $0x710] sm:$0xff]
    %v1486 = vld [vmem:[#allocation8 + $0x718] sm:$0xff]
    %v1487 = vld [vmem:[#allocation8 + $0x720] sm:$0xff]
    %v1488 = vld [vmem:[#allocation8 + $0x728] sm:$0xff]
    %v1489 = vld [vmem:[#allocation8 + $0x730] sm:$0xff]
    %v1490 = vld [vmem:[#allocation8 + $0x738] sm:$0xff]
    %v1491 = vld [vmem:[#allocation8 + $0x740] sm:$0xff]
    %v1492 = vld [vmem:[#allocation8 + $0x748] sm:$0xff]
    %v1493 = vld [vmem:[#allocation8 + $0x750] sm:$0xff]
    %v1494 = vld [vmem:[#allocation8 + $0x758] sm:$0xff]
    %v1495 = vld [vmem:[#allocation8 + $0x760] sm:$0xff]
    %v1496 = vld [vmem:[#allocation8 + $0x768] sm:$0xff]
    %v1497 = vld [vmem:[#allocation8 + $0x770] sm:$0xff]
    %v1498 = vld [vmem:[#allocation8 + $0x778] sm:$0xff]
    %v1499 = vld [vmem:[#allocation8 + $0x780] sm:$0xff]
    %v1500 = vld [vmem:[#allocation8 + $0x788] sm:$0xff]
    %v1501 = vld [vmem:[#allocation8 + $0x790] sm:$0xff]
    %v1502 = vld [vmem:[#allocation8 + $0x798] sm:$0xff]
    %v1503 = vld [vmem:[#allocation8 + $0x7a0] sm:$0xff]
    %v1504 = vld [vmem:[#allocation8 + $0x7a8] sm:$0xff]
    %v1505 = vld [vmem:[#allocation8 + $0x7b0] sm:$0xff]
    %v1506 = vld [vmem:[#allocation8 + $0x7b8] sm:$0xff]
    %v1507 = vld [vmem:[#allocation8 + $0x7c0] sm:$0xff]
    %v1508 = vld [vmem:[#allocation8 + $0x7c8] sm:$0xff]
    %v1509 = vld [vmem:[#allocation8 + $0x7d0] sm:$0xff]
    %v1510 = vld [vmem:[#allocation8 + $0x7d8] sm:$0xff]
    %v1511 = vld [vmem:[#allocation8 + $0x7e0] sm:$0xff]
    %v1512 = vld [vmem:[#allocation8 + $0x7e8] sm:$0xff]
    %v1513 = vld [vmem:[#allocation8 + $0x7f0] sm:$0xff]
    %v1514 = vld [vmem:[#allocation8 + $0x7f8] sm:$0xff]
    %v1515 = vld [vmem:[%s5] sm:$0xf]
    %v1517 = vlaneseq
    %v1518 = vshrl.u32 %v1517, 7
    %v1519 = vsub.s32 0, %v1518
    %v1520 = vrot.slane %v1515, %v1519
    %v1521 = vlaneseq
    %v1522 = vshrl.u32 %v1521, 7
    %v1523 = vsub.s32 1, %v1522
    %v1524 = vrot.slane %v1515, %v1523
    %v1525 = vlaneseq
    %v1526 = vshrl.u32 %v1525, 7
    %v1527 = vsub.s32 2, %v1526
    %v1528 = vrot.slane %v1515, %v1527
    %v1529 = vlaneseq
    %v1530 = vshrl.u32 %v1529, 7
    %v1531 = vsub.s32 3, %v1530
    %v1532 = vrot.slane %v1515, %v1531
    %v1793 = vunpack.c.l.b16 %v1259
    %v1794 = vunpack.c.h.b16 %v1259
    %v1795 = vunpack.c.l.b16 %v1260
    %v1796 = vunpack.c.h.b16 %v1260
    %v1797 = vunpack.c.l.b16 %v1261
    %v1798 = vunpack.c.h.b16 %v1261
    %v1799 = vunpack.c.l.b16 %v1262
    %v1800 = vunpack.c.h.b16 %v1262
    %v1801 = vunpack.c.l.b16 %v1263
    %v1802 = vunpack.c.h.b16 %v1263
    %v1803 = vunpack.c.l.b16 %v1264
    %v1804 = vunpack.c.h.b16 %v1264
    %v1805 = vunpack.c.l.b16 %v1265
    %v1806 = vunpack.c.h.b16 %v1265
    %v1807 = vunpack.c.l.b16 %v1266
    %v1808 = vunpack.c.h.b16 %v1266
    %v1809 = vunpack.c.l.b16 %v1267
    %v1810 = vunpack.c.h.b16 %v1267
    %v1811 = vunpack.c.l.b16 %v1268
    %v1812 = vunpack.c.h.b16 %v1268
    %v1813 = vunpack.c.l.b16 %v1269
    %v1814 = vunpack.c.h.b16 %v1269
    %v1815 = vunpack.c.l.b16 %v1270
    %v1816 = vunpack.c.h.b16 %v1270
    %v1817 = vunpack.c.l.b16 %v1271
    %v1818 = vunpack.c.h.b16 %v1271
    %v1819 = vunpack.c.l.b16 %v1272
    %v1820 = vunpack.c.h.b16 %v1272
    %v1821 = vunpack.c.l.b16 %v1273
    %v1822 = vunpack.c.h.b16 %v1273
    %v1823 = vunpack.c.l.b16 %v1274
    %v1824 = vunpack.c.h.b16 %v1274
    %v1825 = vunpack.c.l.b16 %v1275
    %v1826 = vunpack.c.h.b16 %v1275
    %v1827 = vunpack.c.l.b16 %v1276
    %v1828 = vunpack.c.h.b16 %v1276
    %v1829 = vunpack.c.l.b16 %v1277
    %v1830 = vunpack.c.h.b16 %v1277
    %v1831 = vunpack.c.l.b16 %v1278
    %v1832 = vunpack.c.h.b16 %v1278
    %v1833 = vunpack.c.l.b16 %v1279
    %v1834 = vunpack.c.h.b16 %v1279
    %v1835 = vunpack.c.l.b16 %v1280
    %v1836 = vunpack.c.h.b16 %v1280
    %v1837 = vunpack.c.l.b16 %v1281
    %v1838 = vunpack.c.h.b16 %v1281
    %v1839 = vunpack.c.l.b16 %v1282
    %v1840 = vunpack.c.h.b16 %v1282
    %v1841 = vunpack.c.l.b16 %v1283
    %v1842 = vunpack.c.h.b16 %v1283
    %v1843 = vunpack.c.l.b16 %v1284
    %v1844 = vunpack.c.h.b16 %v1284
    %v1845 = vunpack.c.l.b16 %v1285
    %v1846 = vunpack.c.h.b16 %v1285
    %v1847 = vunpack.c.l.b16 %v1286
    %v1848 = vunpack.c.h.b16 %v1286
    %v1849 = vunpack.c.l.b16 %v1287
    %v1850 = vunpack.c.h.b16 %v1287
    %v1851 = vunpack.c.l.b16 %v1288
    %v1852 = vunpack.c.h.b16 %v1288
    %v1853 = vunpack.c.l.b16 %v1289
    %v1854 = vunpack.c.h.b16 %v1289
    %v1855 = vunpack.c.l.b16 %v1290
    %v1856 = vunpack.c.h.b16 %v1290
    %v1857 = vunpack.c.l.b16 %v1291
    %v1858 = vunpack.c.h.b16 %v1291
    %v1859 = vunpack.c.l.b16 %v1292
    %v1860 = vunpack.c.h.b16 %v1292
    %v1861 = vunpack.c.l.b16 %v1293
    %v1862 = vunpack.c.h.b16 %v1293
    %v1863 = vunpack.c.l.b16 %v1294
    %v1864 = vunpack.c.h.b16 %v1294
    %v1865 = vunpack.c.l.b16 %v1295
    %v1866 = vunpack.c.h.b16 %v1295
    %v1867 = vunpack.c.l.b16 %v1296
    %v1868 = vunpack.c.h.b16 %v1296
    %v1869 = vunpack.c.l.b16 %v1297
    %v1870 = vunpack.c.h.b16 %v1297
    %v1871 = vunpack.c.l.b16 %v1298
    %v1872 = vunpack.c.h.b16 %v1298
    %v1873 = vunpack.c.l.b16 %v1299
    %v1874 = vunpack.c.h.b16 %v1299
    %v1875 = vunpack.c.l.b16 %v1300
    %v1876 = vunpack.c.h.b16 %v1300
    %v1877 = vunpack.c.l.b16 %v1301
    %v1878 = vunpack.c.h.b16 %v1301
    %v1879 = vunpack.c.l.b16 %v1302
    %v1880 = vunpack.c.h.b16 %v1302
    %v1881 = vunpack.c.l.b16 %v1303
    %v1882 = vunpack.c.h.b16 %v1303
    %v1883 = vunpack.c.l.b16 %v1304
    %v1884 = vunpack.c.h.b16 %v1304
    %v1885 = vunpack.c.l.b16 %v1305
    %v1886 = vunpack.c.h.b16 %v1305
    %v1887 = vunpack.c.l.b16 %v1306
    %v1888 = vunpack.c.h.b16 %v1306
    %v1889 = vunpack.c.l.b16 %v1307
    %v1890 = vunpack.c.h.b16 %v1307
    %v1891 = vunpack.c.l.b16 %v1308
    %v1892 = vunpack.c.h.b16 %v1308
    %v1893 = vunpack.c.l.b16 %v1309
    %v1894 = vunpack.c.h.b16 %v1309
    %v1895 = vunpack.c.l.b16 %v1310
    %v1896 = vunpack.c.h.b16 %v1310
    %v1897 = vunpack.c.l.b16 %v1311
    %v1898 = vunpack.c.h.b16 %v1311
    %v1899 = vunpack.c.l.b16 %v1312
    %v1900 = vunpack.c.h.b16 %v1312
    %v1901 = vunpack.c.l.b16 %v1313
    %v1902 = vunpack.c.h.b16 %v1313
    %v1903 = vunpack.c.l.b16 %v1314
    %v1904 = vunpack.c.h.b16 %v1314
    %v1905 = vunpack.c.l.b16 %v1315
    %v1906 = vunpack.c.h.b16 %v1315
    %v1907 = vunpack.c.l.b16 %v1316
    %v1908 = vunpack.c.h.b16 %v1316
    %v1909 = vunpack.c.l.b16 %v1317
    %v1910 = vunpack.c.h.b16 %v1317
    %v1911 = vunpack.c.l.b16 %v1318
    %v1912 = vunpack.c.h.b16 %v1318
    %v1913 = vunpack.c.l.b16 %v1319
    %v1914 = vunpack.c.h.b16 %v1319
    %v1915 = vunpack.c.l.b16 %v1320
    %v1916 = vunpack.c.h.b16 %v1320
    %v1917 = vunpack.c.l.b16 %v1321
    %v1918 = vunpack.c.h.b16 %v1321
    %v1919 = vunpack.c.l.b16 %v1322
    %v1920 = vunpack.c.h.b16 %v1322
    %v1921 = vunpack.c.l.b16 %v1323
    %v1922 = vunpack.c.h.b16 %v1323
    %v1923 = vunpack.c.l.b16 %v1324
    %v1924 = vunpack.c.h.b16 %v1324
    %v1925 = vunpack.c.l.b16 %v1325
    %v1926 = vunpack.c.h.b16 %v1325
    %v1927 = vunpack.c.l.b16 %v1326
    %v1928 = vunpack.c.h.b16 %v1326
    %v1929 = vunpack.c.l.b16 %v1327
    %v1930 = vunpack.c.h.b16 %v1327
    %v1931 = vunpack.c.l.b16 %v1328
    %v1932 = vunpack.c.h.b16 %v1328
    %v1933 = vunpack.c.l.b16 %v1329
    %v1934 = vunpack.c.h.b16 %v1329
    %v1935 = vunpack.c.l.b16 %v1330
    %v1936 = vunpack.c.h.b16 %v1330
    %v1937 = vunpack.c.l.b16 %v1331
    %v1938 = vunpack.c.h.b16 %v1331
    %v1939 = vunpack.c.l.b16 %v1332
    %v1940 = vunpack.c.h.b16 %v1332
    %v1941 = vunpack.c.l.b16 %v1333
    %v1942 = vunpack.c.h.b16 %v1333
    %v1943 = vunpack.c.l.b16 %v1334
    %v1944 = vunpack.c.h.b16 %v1334
    %v1945 = vunpack.c.l.b16 %v1335
    %v1946 = vunpack.c.h.b16 %v1335
    %v1947 = vunpack.c.l.b16 %v1336
    %v1948 = vunpack.c.h.b16 %v1336
    %v1949 = vunpack.c.l.b16 %v1337
    %v1950 = vunpack.c.h.b16 %v1337
    %v1951 = vunpack.c.l.b16 %v1338
    %v1952 = vunpack.c.h.b16 %v1338
    %v1953 = vunpack.c.l.b16 %v1339
    %v1954 = vunpack.c.h.b16 %v1339
    %v1955 = vunpack.c.l.b16 %v1340
    %v1956 = vunpack.c.h.b16 %v1340
    %v1957 = vunpack.c.l.b16 %v1341
    %v1958 = vunpack.c.h.b16 %v1341
    %v1959 = vunpack.c.l.b16 %v1342
    %v1960 = vunpack.c.h.b16 %v1342
    %v1961 = vunpack.c.l.b16 %v1343
    %v1962 = vunpack.c.h.b16 %v1343
    %v1963 = vunpack.c.l.b16 %v1344
    %v1964 = vunpack.c.h.b16 %v1344
    %v1965 = vunpack.c.l.b16 %v1345
    %v1966 = vunpack.c.h.b16 %v1345
    %v1967 = vunpack.c.l.b16 %v1346
    %v1968 = vunpack.c.h.b16 %v1346
    %v1969 = vunpack.c.l.b16 %v1347
    %v1970 = vunpack.c.h.b16 %v1347
    %v1971 = vunpack.c.l.b16 %v1348
    %v1972 = vunpack.c.h.b16 %v1348
    %v1973 = vunpack.c.l.b16 %v1349
    %v1974 = vunpack.c.h.b16 %v1349
    %v1975 = vunpack.c.l.b16 %v1350
    %v1976 = vunpack.c.h.b16 %v1350
    %v1977 = vunpack.c.l.b16 %v1351
    %v1978 = vunpack.c.h.b16 %v1351
    %v1979 = vunpack.c.l.b16 %v1352
    %v1980 = vunpack.c.h.b16 %v1352
    %v1981 = vunpack.c.l.b16 %v1353
    %v1982 = vunpack.c.h.b16 %v1353
    %v1983 = vunpack.c.l.b16 %v1354
    %v1984 = vunpack.c.h.b16 %v1354
    %v1985 = vunpack.c.l.b16 %v1355
    %v1986 = vunpack.c.h.b16 %v1355
    %v1987 = vunpack.c.l.b16 %v1356
    %v1988 = vunpack.c.h.b16 %v1356
    %v1989 = vunpack.c.l.b16 %v1357
    %v1990 = vunpack.c.h.b16 %v1357
    %v1991 = vunpack.c.l.b16 %v1358
    %v1992 = vunpack.c.h.b16 %v1358
    %v1993 = vunpack.c.l.b16 %v1359
    %v1994 = vunpack.c.h.b16 %v1359
    %v1995 = vunpack.c.l.b16 %v1360
    %v1996 = vunpack.c.h.b16 %v1360
    %v1997 = vunpack.c.l.b16 %v1361
    %v1998 = vunpack.c.h.b16 %v1361
    %v1999 = vunpack.c.l.b16 %v1362
    %v2000 = vunpack.c.h.b16 %v1362
    %v2001 = vunpack.c.l.b16 %v1363
    %v2002 = vunpack.c.h.b16 %v1363
    %v2003 = vunpack.c.l.b16 %v1364
    %v2004 = vunpack.c.h.b16 %v1364
    %v2005 = vunpack.c.l.b16 %v1365
    %v2006 = vunpack.c.h.b16 %v1365
    %v2007 = vunpack.c.l.b16 %v1366
    %v2008 = vunpack.c.h.b16 %v1366
    %v2009 = vunpack.c.l.b16 %v1367
    %v2010 = vunpack.c.h.b16 %v1367
    %v2011 = vunpack.c.l.b16 %v1368
    %v2012 = vunpack.c.h.b16 %v1368
    %v2013 = vunpack.c.l.b16 %v1369
    %v2014 = vunpack.c.h.b16 %v1369
    %v2015 = vunpack.c.l.b16 %v1370
    %v2016 = vunpack.c.h.b16 %v1370
    %v2017 = vunpack.c.l.b16 %v1371
    %v2018 = vunpack.c.h.b16 %v1371
    %v2019 = vunpack.c.l.b16 %v1372
    %v2020 = vunpack.c.h.b16 %v1372
    %v2021 = vunpack.c.l.b16 %v1373
    %v2022 = vunpack.c.h.b16 %v1373
    %v2023 = vunpack.c.l.b16 %v1374
    %v2024 = vunpack.c.h.b16 %v1374
    %v2025 = vunpack.c.l.b16 %v1375
    %v2026 = vunpack.c.h.b16 %v1375
    %v2027 = vunpack.c.l.b16 %v1376
    %v2028 = vunpack.c.h.b16 %v1376
    %v2029 = vunpack.c.l.b16 %v1377
    %v2030 = vunpack.c.h.b16 %v1377
    %v2031 = vunpack.c.l.b16 %v1378
    %v2032 = vunpack.c.h.b16 %v1378
    %v2033 = vunpack.c.l.b16 %v1379
    %v2034 = vunpack.c.h.b16 %v1379
    %v2035 = vunpack.c.l.b16 %v1380
    %v2036 = vunpack.c.h.b16 %v1380
    %v2037 = vunpack.c.l.b16 %v1381
    %v2038 = vunpack.c.h.b16 %v1381
    %v2039 = vunpack.c.l.b16 %v1382
    %v2040 = vunpack.c.h.b16 %v1382
    %v2041 = vunpack.c.l.b16 %v1383
    %v2042 = vunpack.c.h.b16 %v1383
    %v2043 = vunpack.c.l.b16 %v1384
    %v2044 = vunpack.c.h.b16 %v1384
    %v2045 = vunpack.c.l.b16 %v1385
    %v2046 = vunpack.c.h.b16 %v1385
    %v2047 = vunpack.c.l.b16 %v1386
    %v2048 = vunpack.c.h.b16 %v1386
    %v2049 = vunpack.c.l.b16 %v1387
    %v2050 = vunpack.c.h.b16 %v1387
    %v2051 = vunpack.c.l.b16 %v1388
    %v2052 = vunpack.c.h.b16 %v1388
    %v2053 = vunpack.c.l.b16 %v1389
    %v2054 = vunpack.c.h.b16 %v1389
    %v2055 = vunpack.c.l.b16 %v1390
    %v2056 = vunpack.c.h.b16 %v1390
    %v2057 = vunpack.c.l.b16 %v1391
    %v2058 = vunpack.c.h.b16 %v1391
    %v2059 = vunpack.c.l.b16 %v1392
    %v2060 = vunpack.c.h.b16 %v1392
    %v2061 = vunpack.c.l.b16 %v1393
    %v2062 = vunpack.c.h.b16 %v1393
    %v2063 = vunpack.c.l.b16 %v1394
    %v2064 = vunpack.c.h.b16 %v1394
    %v2065 = vunpack.c.l.b16 %v1395
    %v2066 = vunpack.c.h.b16 %v1395
    %v2067 = vunpack.c.l.b16 %v1396
    %v2068 = vunpack.c.h.b16 %v1396
    %v2069 = vunpack.c.l.b16 %v1397
    %v2070 = vunpack.c.h.b16 %v1397
    %v2071 = vunpack.c.l.b16 %v1398
    %v2072 = vunpack.c.h.b16 %v1398
    %v2073 = vunpack.c.l.b16 %v1399
    %v2074 = vunpack.c.h.b16 %v1399
    %v2075 = vunpack.c.l.b16 %v1400
    %v2076 = vunpack.c.h.b16 %v1400
    %v2077 = vunpack.c.l.b16 %v1401
    %v2078 = vunpack.c.h.b16 %v1401
    %v2079 = vunpack.c.l.b16 %v1402
    %v2080 = vunpack.c.h.b16 %v1402
    %v2081 = vunpack.c.l.b16 %v1403
    %v2082 = vunpack.c.h.b16 %v1403
    %v2083 = vunpack.c.l.b16 %v1404
    %v2084 = vunpack.c.h.b16 %v1404
    %v2085 = vunpack.c.l.b16 %v1405
    %v2086 = vunpack.c.h.b16 %v1405
    %v2087 = vunpack.c.l.b16 %v1406
    %v2088 = vunpack.c.h.b16 %v1406
    %v2089 = vunpack.c.l.b16 %v1407
    %v2090 = vunpack.c.h.b16 %v1407
    %v2091 = vunpack.c.l.b16 %v1408
    %v2092 = vunpack.c.h.b16 %v1408
    %v2093 = vunpack.c.l.b16 %v1409
    %v2094 = vunpack.c.h.b16 %v1409
    %v2095 = vunpack.c.l.b16 %v1410
    %v2096 = vunpack.c.h.b16 %v1410
    %v2097 = vunpack.c.l.b16 %v1411
    %v2098 = vunpack.c.h.b16 %v1411
    %v2099 = vunpack.c.l.b16 %v1412
    %v2100 = vunpack.c.h.b16 %v1412
    %v2101 = vunpack.c.l.b16 %v1413
    %v2102 = vunpack.c.h.b16 %v1413
    %v2103 = vunpack.c.l.b16 %v1414
    %v2104 = vunpack.c.h.b16 %v1414
    %v2105 = vunpack.c.l.b16 %v1415
    %v2106 = vunpack.c.h.b16 %v1415
    %v2107 = vunpack.c.l.b16 %v1416
    %v2108 = vunpack.c.h.b16 %v1416
    %v2109 = vunpack.c.l.b16 %v1417
    %v2110 = vunpack.c.h.b16 %v1417
    %v2111 = vunpack.c.l.b16 %v1418
    %v2112 = vunpack.c.h.b16 %v1418
    %v2113 = vunpack.c.l.b16 %v1419
    %v2114 = vunpack.c.h.b16 %v1419
    %v2115 = vunpack.c.l.b16 %v1420
    %v2116 = vunpack.c.h.b16 %v1420
    %v2117 = vunpack.c.l.b16 %v1421
    %v2118 = vunpack.c.h.b16 %v1421
    %v2119 = vunpack.c.l.b16 %v1422
    %v2120 = vunpack.c.h.b16 %v1422
    %v2121 = vunpack.c.l.b16 %v1423
    %v2122 = vunpack.c.h.b16 %v1423
    %v2123 = vunpack.c.l.b16 %v1424
    %v2124 = vunpack.c.h.b16 %v1424
    %v2125 = vunpack.c.l.b16 %v1425
    %v2126 = vunpack.c.h.b16 %v1425
    %v2127 = vunpack.c.l.b16 %v1426
    %v2128 = vunpack.c.h.b16 %v1426
    %v2129 = vunpack.c.l.b16 %v1427
    %v2130 = vunpack.c.h.b16 %v1427
    %v2131 = vunpack.c.l.b16 %v1428
    %v2132 = vunpack.c.h.b16 %v1428
    %v2133 = vunpack.c.l.b16 %v1429
    %v2134 = vunpack.c.h.b16 %v1429
    %v2135 = vunpack.c.l.b16 %v1430
    %v2136 = vunpack.c.h.b16 %v1430
    %v2137 = vunpack.c.l.b16 %v1431
    %v2138 = vunpack.c.h.b16 %v1431
    %v2139 = vunpack.c.l.b16 %v1432
    %v2140 = vunpack.c.h.b16 %v1432
    %v2141 = vunpack.c.l.b16 %v1433
    %v2142 = vunpack.c.h.b16 %v1433
    %v2143 = vunpack.c.l.b16 %v1434
    %v2144 = vunpack.c.h.b16 %v1434
    %v2145 = vunpack.c.l.b16 %v1435
    %v2146 = vunpack.c.h.b16 %v1435
    %v2147 = vunpack.c.l.b16 %v1436
    %v2148 = vunpack.c.h.b16 %v1436
    %v2149 = vunpack.c.l.b16 %v1437
    %v2150 = vunpack.c.h.b16 %v1437
    %v2151 = vunpack.c.l.b16 %v1438
    %v2152 = vunpack.c.h.b16 %v1438
    %v2153 = vunpack.c.l.b16 %v1439
    %v2154 = vunpack.c.h.b16 %v1439
    %v2155 = vunpack.c.l.b16 %v1440
    %v2156 = vunpack.c.h.b16 %v1440
    %v2157 = vunpack.c.l.b16 %v1441
    %v2158 = vunpack.c.h.b16 %v1441
    %v2159 = vunpack.c.l.b16 %v1442
    %v2160 = vunpack.c.h.b16 %v1442
    %v2161 = vunpack.c.l.b16 %v1443
    %v2162 = vunpack.c.h.b16 %v1443
    %v2163 = vunpack.c.l.b16 %v1444
    %v2164 = vunpack.c.h.b16 %v1444
    %v2165 = vunpack.c.l.b16 %v1445
    %v2166 = vunpack.c.h.b16 %v1445
    %v2167 = vunpack.c.l.b16 %v1446
    %v2168 = vunpack.c.h.b16 %v1446
    %v2169 = vunpack.c.l.b16 %v1447
    %v2170 = vunpack.c.h.b16 %v1447
    %v2171 = vunpack.c.l.b16 %v1448
    %v2172 = vunpack.c.h.b16 %v1448
    %v2173 = vunpack.c.l.b16 %v1449
    %v2174 = vunpack.c.h.b16 %v1449
    %v2175 = vunpack.c.l.b16 %v1450
    %v2176 = vunpack.c.h.b16 %v1450
    %v2177 = vunpack.c.l.b16 %v1451
    %v2178 = vunpack.c.h.b16 %v1451
    %v2179 = vunpack.c.l.b16 %v1452
    %v2180 = vunpack.c.h.b16 %v1452
    %v2181 = vunpack.c.l.b16 %v1453
    %v2182 = vunpack.c.h.b16 %v1453
    %v2183 = vunpack.c.l.b16 %v1454
    %v2184 = vunpack.c.h.b16 %v1454
    %v2185 = vunpack.c.l.b16 %v1455
    %v2186 = vunpack.c.h.b16 %v1455
    %v2187 = vunpack.c.l.b16 %v1456
    %v2188 = vunpack.c.h.b16 %v1456
    %v2189 = vunpack.c.l.b16 %v1457
    %v2190 = vunpack.c.h.b16 %v1457
    %v2191 = vunpack.c.l.b16 %v1458
    %v2192 = vunpack.c.h.b16 %v1458
    %v2193 = vunpack.c.l.b16 %v1459
    %v2194 = vunpack.c.h.b16 %v1459
    %v2195 = vunpack.c.l.b16 %v1460
    %v2196 = vunpack.c.h.b16 %v1460
    %v2197 = vunpack.c.l.b16 %v1461
    %v2198 = vunpack.c.h.b16 %v1461
    %v2199 = vunpack.c.l.b16 %v1462
    %v2200 = vunpack.c.h.b16 %v1462
    %v2201 = vunpack.c.l.b16 %v1463
    %v2202 = vunpack.c.h.b16 %v1463
    %v2203 = vunpack.c.l.b16 %v1464
    %v2204 = vunpack.c.h.b16 %v1464
    %v2205 = vunpack.c.l.b16 %v1465
    %v2206 = vunpack.c.h.b16 %v1465
    %v2207 = vunpack.c.l.b16 %v1466
    %v2208 = vunpack.c.h.b16 %v1466
    %v2209 = vunpack.c.l.b16 %v1467
    %v2210 = vunpack.c.h.b16 %v1467
    %v2211 = vunpack.c.l.b16 %v1468
    %v2212 = vunpack.c.h.b16 %v1468
    %v2213 = vunpack.c.l.b16 %v1469
    %v2214 = vunpack.c.h.b16 %v1469
    %v2215 = vunpack.c.l.b16 %v1470
    %v2216 = vunpack.c.h.b16 %v1470
    %v2217 = vunpack.c.l.b16 %v1471
    %v2218 = vunpack.c.h.b16 %v1471
    %v2219 = vunpack.c.l.b16 %v1472
    %v2220 = vunpack.c.h.b16 %v1472
    %v2221 = vunpack.c.l.b16 %v1473
    %v2222 = vunpack.c.h.b16 %v1473
    %v2223 = vunpack.c.l.b16 %v1474
    %v2224 = vunpack.c.h.b16 %v1474
    %v2225 = vunpack.c.l.b16 %v1475
    %v2226 = vunpack.c.h.b16 %v1475
    %v2227 = vunpack.c.l.b16 %v1476
    %v2228 = vunpack.c.h.b16 %v1476
    %v2229 = vunpack.c.l.b16 %v1477
    %v2230 = vunpack.c.h.b16 %v1477
    %v2231 = vunpack.c.l.b16 %v1478
    %v2232 = vunpack.c.h.b16 %v1478
    %v2233 = vunpack.c.l.b16 %v1479
    %v2234 = vunpack.c.h.b16 %v1479
    %v2235 = vunpack.c.l.b16 %v1480
    %v2236 = vunpack.c.h.b16 %v1480
    %v2237 = vunpack.c.l.b16 %v1481
    %v2238 = vunpack.c.h.b16 %v1481
    %v2239 = vunpack.c.l.b16 %v1482
    %v2240 = vunpack.c.h.b16 %v1482
    %v2241 = vunpack.c.l.b16 %v1483
    %v2242 = vunpack.c.h.b16 %v1483
    %v2243 = vunpack.c.l.b16 %v1484
    %v2244 = vunpack.c.h.b16 %v1484
    %v2245 = vunpack.c.l.b16 %v1485
    %v2246 = vunpack.c.h.b16 %v1485
    %v2247 = vunpack.c.l.b16 %v1486
    %v2248 = vunpack.c.h.b16 %v1486
    %v2249 = vunpack.c.l.b16 %v1487
    %v2250 = vunpack.c.h.b16 %v1487
    %v2251 = vunpack.c.l.b16 %v1488
    %v2252 = vunpack.c.h.b16 %v1488
    %v2253 = vunpack.c.l.b16 %v1489
    %v2254 = vunpack.c.h.b16 %v1489
    %v2255 = vunpack.c.l.b16 %v1490
    %v2256 = vunpack.c.h.b16 %v1490
    %v2257 = vunpack.c.l.b16 %v1491
    %v2258 = vunpack.c.h.b16 %v1491
    %v2259 = vunpack.c.l.b16 %v1492
    %v2260 = vunpack.c.h.b16 %v1492
    %v2261 = vunpack.c.l.b16 %v1493
    %v2262 = vunpack.c.h.b16 %v1493
    %v2263 = vunpack.c.l.b16 %v1494
    %v2264 = vunpack.c.h.b16 %v1494
    %v2265 = vunpack.c.l.b16 %v1495
    %v2266 = vunpack.c.h.b16 %v1495
    %v2267 = vunpack.c.l.b16 %v1496
    %v2268 = vunpack.c.h.b16 %v1496
    %v2269 = vunpack.c.l.b16 %v1497
    %v2270 = vunpack.c.h.b16 %v1497
    %v2271 = vunpack.c.l.b16 %v1498
    %v2272 = vunpack.c.h.b16 %v1498
    %v2273 = vunpack.c.l.b16 %v1499
    %v2274 = vunpack.c.h.b16 %v1499
    %v2275 = vunpack.c.l.b16 %v1500
    %v2276 = vunpack.c.h.b16 %v1500
    %v2277 = vunpack.c.l.b16 %v1501
    %v2278 = vunpack.c.h.b16 %v1501
    %v2279 = vunpack.c.l.b16 %v1502
    %v2280 = vunpack.c.h.b16 %v1502
    %v2281 = vunpack.c.l.b16 %v1503
    %v2282 = vunpack.c.h.b16 %v1503
    %v2283 = vunpack.c.l.b16 %v1504
    %v2284 = vunpack.c.h.b16 %v1504
    %v2285 = vunpack.c.l.b16 %v1505
    %v2286 = vunpack.c.h.b16 %v1505
    %v2287 = vunpack.c.l.b16 %v1506
    %v2288 = vunpack.c.h.b16 %v1506
    %v2289 = vunpack.c.l.b16 %v1507
    %v2290 = vunpack.c.h.b16 %v1507
    %v2291 = vunpack.c.l.b16 %v1508
    %v2292 = vunpack.c.h.b16 %v1508
    %v2293 = vunpack.c.l.b16 %v1509
    %v2294 = vunpack.c.h.b16 %v1509
    %v2295 = vunpack.c.l.b16 %v1510
    %v2296 = vunpack.c.h.b16 %v1510
    %v2297 = vunpack.c.l.b16 %v1511
    %v2298 = vunpack.c.h.b16 %v1511
    %v2299 = vunpack.c.l.b16 %v1512
    %v2300 = vunpack.c.h.b16 %v1512
    %v2301 = vunpack.c.l.b16 %v1513
    %v2302 = vunpack.c.h.b16 %v1513
    %v2303 = vunpack.c.l.b16 %v1514
    %v2304 = vunpack.c.h.b16 %v1514
    %v2305 = vpack.c.b16 %v1797, %v1793
    %v2306 = vpack.c.b16 %v1798, %v1794
    %v2307 = vpack.c.b16 %v1799, %v1795
    %v2308 = vpack.c.b16 %v1800, %v1796
    %v2309 = vpack.c.b16 %v1805, %v1801
    %v2310 = vpack.c.b16 %v1806, %v1802
    %v2311 = vpack.c.b16 %v1807, %v1803
    %v2312 = vpack.c.b16 %v1808, %v1804
    %v2313 = vpack.c.b16 %v1813, %v1809
    %v2314 = vpack.c.b16 %v1814, %v1810
    %v2315 = vpack.c.b16 %v1815, %v1811
    %v2316 = vpack.c.b16 %v1816, %v1812
    %v2317 = vpack.c.b16 %v1821, %v1817
    %v2318 = vpack.c.b16 %v1822, %v1818
    %v2319 = vpack.c.b16 %v1823, %v1819
    %v2320 = vpack.c.b16 %v1824, %v1820
    %v2321 = vpack.c.b16 %v1829, %v1825
    %v2322 = vpack.c.b16 %v1830, %v1826
    %v2323 = vpack.c.b16 %v1831, %v1827
    %v2324 = vpack.c.b16 %v1832, %v1828
    %v2325 = vpack.c.b16 %v1837, %v1833
    %v2326 = vpack.c.b16 %v1838, %v1834
    %v2327 = vpack.c.b16 %v1839, %v1835
    %v2328 = vpack.c.b16 %v1840, %v1836
    %v2329 = vpack.c.b16 %v1845, %v1841
    %v2330 = vpack.c.b16 %v1846, %v1842
    %v2331 = vpack.c.b16 %v1847, %v1843
    %v2332 = vpack.c.b16 %v1848, %v1844
    %v2333 = vpack.c.b16 %v1853, %v1849
    %v2334 = vpack.c.b16 %v1854, %v1850
    %v2335 = vpack.c.b16 %v1855, %v1851
    %v2336 = vpack.c.b16 %v1856, %v1852
    %v2337 = vpack.c.b16 %v1861, %v1857
    %v2338 = vpack.c.b16 %v1862, %v1858
    %v2339 = vpack.c.b16 %v1863, %v1859
    %v2340 = vpack.c.b16 %v1864, %v1860
    %v2341 = vpack.c.b16 %v1869, %v1865
    %v2342 = vpack.c.b16 %v1870, %v1866
    %v2343 = vpack.c.b16 %v1871, %v1867
    %v2344 = vpack.c.b16 %v1872, %v1868
    %v2345 = vpack.c.b16 %v1877, %v1873
    %v2346 = vpack.c.b16 %v1878, %v1874
    %v2347 = vpack.c.b16 %v1879, %v1875
    %v2348 = vpack.c.b16 %v1880, %v1876
    %v2349 = vpack.c.b16 %v1885, %v1881
    %v2350 = vpack.c.b16 %v1886, %v1882
    %v2351 = vpack.c.b16 %v1887, %v1883
    %v2352 = vpack.c.b16 %v1888, %v1884
    %v2353 = vpack.c.b16 %v1893, %v1889
    %v2354 = vpack.c.b16 %v1894, %v1890
    %v2355 = vpack.c.b16 %v1895, %v1891
    %v2356 = vpack.c.b16 %v1896, %v1892
    %v2357 = vpack.c.b16 %v1901, %v1897
    %v2358 = vpack.c.b16 %v1902, %v1898
    %v2359 = vpack.c.b16 %v1903, %v1899
    %v2360 = vpack.c.b16 %v1904, %v1900
    %v2361 = vpack.c.b16 %v1909, %v1905
    %v2362 = vpack.c.b16 %v1910, %v1906
    %v2363 = vpack.c.b16 %v1911, %v1907
    %v2364 = vpack.c.b16 %v1912, %v1908
    %v2365 = vpack.c.b16 %v1917, %v1913
    %v2366 = vpack.c.b16 %v1918, %v1914
    %v2367 = vpack.c.b16 %v1919, %v1915
    %v2368 = vpack.c.b16 %v1920, %v1916
    %v2369 = vpack.c.b16 %v1925, %v1921
    %v2370 = vpack.c.b16 %v1926, %v1922
    %v2371 = vpack.c.b16 %v1927, %v1923
    %v2372 = vpack.c.b16 %v1928, %v1924
    %v2373 = vpack.c.b16 %v1933, %v1929
    %v2374 = vpack.c.b16 %v1934, %v1930
    %v2375 = vpack.c.b16 %v1935, %v1931
    %v2376 = vpack.c.b16 %v1936, %v1932
    %v2377 = vpack.c.b16 %v1941, %v1937
    %v2378 = vpack.c.b16 %v1942, %v1938
    %v2379 = vpack.c.b16 %v1943, %v1939
    %v2380 = vpack.c.b16 %v1944, %v1940
    %v2381 = vpack.c.b16 %v1949, %v1945
    %v2382 = vpack.c.b16 %v1950, %v1946
    %v2383 = vpack.c.b16 %v1951, %v1947
    %v2384 = vpack.c.b16 %v1952, %v1948
    %v2385 = vpack.c.b16 %v1957, %v1953
    %v2386 = vpack.c.b16 %v1958, %v1954
    %v2387 = vpack.c.b16 %v1959, %v1955
    %v2388 = vpack.c.b16 %v1960, %v1956
    %v2389 = vpack.c.b16 %v1965, %v1961
    %v2390 = vpack.c.b16 %v1966, %v1962
    %v2391 = vpack.c.b16 %v1967, %v1963
    %v2392 = vpack.c.b16 %v1968, %v1964
    %v2393 = vpack.c.b16 %v1973, %v1969
    %v2394 = vpack.c.b16 %v1974, %v1970
    %v2395 = vpack.c.b16 %v1975, %v1971
    %v2396 = vpack.c.b16 %v1976, %v1972
    %v2397 = vpack.c.b16 %v1981, %v1977
    %v2398 = vpack.c.b16 %v1982, %v1978
    %v2399 = vpack.c.b16 %v1983, %v1979
    %v2400 = vpack.c.b16 %v1984, %v1980
    %v2401 = vpack.c.b16 %v1989, %v1985
    %v2402 = vpack.c.b16 %v1990, %v1986
    %v2403 = vpack.c.b16 %v1991, %v1987
    %v2404 = vpack.c.b16 %v1992, %v1988
    %v2405 = vpack.c.b16 %v1997, %v1993
    %v2406 = vpack.c.b16 %v1998, %v1994
    %v2407 = vpack.c.b16 %v1999, %v1995
    %v2408 = vpack.c.b16 %v2000, %v1996
    %v2409 = vpack.c.b16 %v2005, %v2001
    %v2410 = vpack.c.b16 %v2006, %v2002
    %v2411 = vpack.c.b16 %v2007, %v2003
    %v2412 = vpack.c.b16 %v2008, %v2004
    %v2413 = vpack.c.b16 %v2013, %v2009
    %v2414 = vpack.c.b16 %v2014, %v2010
    %v2415 = vpack.c.b16 %v2015, %v2011
    %v2416 = vpack.c.b16 %v2016, %v2012
    %v2417 = vpack.c.b16 %v2021, %v2017
    %v2418 = vpack.c.b16 %v2022, %v2018
    %v2419 = vpack.c.b16 %v2023, %v2019
    %v2420 = vpack.c.b16 %v2024, %v2020
    %v2421 = vpack.c.b16 %v2029, %v2025
    %v2422 = vpack.c.b16 %v2030, %v2026
    %v2423 = vpack.c.b16 %v2031, %v2027
    %v2424 = vpack.c.b16 %v2032, %v2028
    %v2425 = vpack.c.b16 %v2037, %v2033
    %v2426 = vpack.c.b16 %v2038, %v2034
    %v2427 = vpack.c.b16 %v2039, %v2035
    %v2428 = vpack.c.b16 %v2040, %v2036
    %v2429 = vpack.c.b16 %v2045, %v2041
    %v2430 = vpack.c.b16 %v2046, %v2042
    %v2431 = vpack.c.b16 %v2047, %v2043
    %v2432 = vpack.c.b16 %v2048, %v2044
    %v2433 = vpack.c.b16 %v2053, %v2049
    %v2434 = vpack.c.b16 %v2054, %v2050
    %v2435 = vpack.c.b16 %v2055, %v2051
    %v2436 = vpack.c.b16 %v2056, %v2052
    %v2437 = vpack.c.b16 %v2061, %v2057
    %v2438 = vpack.c.b16 %v2062, %v2058
    %v2439 = vpack.c.b16 %v2063, %v2059
    %v2440 = vpack.c.b16 %v2064, %v2060
    %v2441 = vpack.c.b16 %v2069, %v2065
    %v2442 = vpack.c.b16 %v2070, %v2066
    %v2443 = vpack.c.b16 %v2071, %v2067
    %v2444 = vpack.c.b16 %v2072, %v2068
    %v2445 = vpack.c.b16 %v2077, %v2073
    %v2446 = vpack.c.b16 %v2078, %v2074
    %v2447 = vpack.c.b16 %v2079, %v2075
    %v2448 = vpack.c.b16 %v2080, %v2076
    %v2449 = vpack.c.b16 %v2085, %v2081
    %v2450 = vpack.c.b16 %v2086, %v2082
    %v2451 = vpack.c.b16 %v2087, %v2083
    %v2452 = vpack.c.b16 %v2088, %v2084
    %v2453 = vpack.c.b16 %v2093, %v2089
    %v2454 = vpack.c.b16 %v2094, %v2090
    %v2455 = vpack.c.b16 %v2095, %v2091
    %v2456 = vpack.c.b16 %v2096, %v2092
    %v2457 = vpack.c.b16 %v2101, %v2097
    %v2458 = vpack.c.b16 %v2102, %v2098
    %v2459 = vpack.c.b16 %v2103, %v2099
    %v2460 = vpack.c.b16 %v2104, %v2100
    %v2461 = vpack.c.b16 %v2109, %v2105
    %v2462 = vpack.c.b16 %v2110, %v2106
    %v2463 = vpack.c.b16 %v2111, %v2107
    %v2464 = vpack.c.b16 %v2112, %v2108
    %v2465 = vpack.c.b16 %v2117, %v2113
    %v2466 = vpack.c.b16 %v2118, %v2114
    %v2467 = vpack.c.b16 %v2119, %v2115
    %v2468 = vpack.c.b16 %v2120, %v2116
    %v2469 = vpack.c.b16 %v2125, %v2121
    %v2470 = vpack.c.b16 %v2126, %v2122
    %v2471 = vpack.c.b16 %v2127, %v2123
    %v2472 = vpack.c.b16 %v2128, %v2124
    %v2473 = vpack.c.b16 %v2133, %v2129
    %v2474 = vpack.c.b16 %v2134, %v2130
    %v2475 = vpack.c.b16 %v2135, %v2131
    %v2476 = vpack.c.b16 %v2136, %v2132
    %v2477 = vpack.c.b16 %v2141, %v2137
    %v2478 = vpack.c.b16 %v2142, %v2138
    %v2479 = vpack.c.b16 %v2143, %v2139
    %v2480 = vpack.c.b16 %v2144, %v2140
    %v2481 = vpack.c.b16 %v2149, %v2145
    %v2482 = vpack.c.b16 %v2150, %v2146
    %v2483 = vpack.c.b16 %v2151, %v2147
    %v2484 = vpack.c.b16 %v2152, %v2148
    %v2485 = vpack.c.b16 %v2157, %v2153
    %v2486 = vpack.c.b16 %v2158, %v2154
    %v2487 = vpack.c.b16 %v2159, %v2155
    %v2488 = vpack.c.b16 %v2160, %v2156
    %v2489 = vpack.c.b16 %v2165, %v2161
    %v2490 = vpack.c.b16 %v2166, %v2162
    %v2491 = vpack.c.b16 %v2167, %v2163
    %v2492 = vpack.c.b16 %v2168, %v2164
    %v2493 = vpack.c.b16 %v2173, %v2169
    %v2494 = vpack.c.b16 %v2174, %v2170
    %v2495 = vpack.c.b16 %v2175, %v2171
    %v2496 = vpack.c.b16 %v2176, %v2172
    %v2497 = vpack.c.b16 %v2181, %v2177
    %v2498 = vpack.c.b16 %v2182, %v2178
    %v2499 = vpack.c.b16 %v2183, %v2179
    %v2500 = vpack.c.b16 %v2184, %v2180
    %v2501 = vpack.c.b16 %v2189, %v2185
    %v2502 = vpack.c.b16 %v2190, %v2186
    %v2503 = vpack.c.b16 %v2191, %v2187
    %v2504 = vpack.c.b16 %v2192, %v2188
    %v2505 = vpack.c.b16 %v2197, %v2193
    %v2506 = vpack.c.b16 %v2198, %v2194
    %v2507 = vpack.c.b16 %v2199, %v2195
    %v2508 = vpack.c.b16 %v2200, %v2196
    %v2509 = vpack.c.b16 %v2205, %v2201
    %v2510 = vpack.c.b16 %v2206, %v2202
    %v2511 = vpack.c.b16 %v2207, %v2203
    %v2512 = vpack.c.b16 %v2208, %v2204
    %v2513 = vpack.c.b16 %v2213, %v2209
    %v2514 = vpack.c.b16 %v2214, %v2210
    %v2515 = vpack.c.b16 %v2215, %v2211
    %v2516 = vpack.c.b16 %v2216, %v2212
    %v2517 = vpack.c.b16 %v2221, %v2217
    %v2518 = vpack.c.b16 %v2222, %v2218
    %v2519 = vpack.c.b16 %v2223, %v2219
    %v2520 = vpack.c.b16 %v2224, %v2220
    %v2521 = vpack.c.b16 %v2229, %v2225
    %v2522 = vpack.c.b16 %v2230, %v2226
    %v2523 = vpack.c.b16 %v2231, %v2227
    %v2524 = vpack.c.b16 %v2232, %v2228
    %v2525 = vpack.c.b16 %v2237, %v2233
    %v2526 = vpack.c.b16 %v2238, %v2234
    %v2527 = vpack.c.b16 %v2239, %v2235
    %v2528 = vpack.c.b16 %v2240, %v2236
    %v2529 = vpack.c.b16 %v2245, %v2241
    %v2530 = vpack.c.b16 %v2246, %v2242
    %v2531 = vpack.c.b16 %v2247, %v2243
    %v2532 = vpack.c.b16 %v2248, %v2244
    %v2533 = vpack.c.b16 %v2253, %v2249
    %v2534 = vpack.c.b16 %v2254, %v2250
    %v2535 = vpack.c.b16 %v2255, %v2251
    %v2536 = vpack.c.b16 %v2256, %v2252
    %v2537 = vpack.c.b16 %v2261, %v2257
    %v2538 = vpack.c.b16 %v2262, %v2258
    %v2539 = vpack.c.b16 %v2263, %v2259
    %v2540 = vpack.c.b16 %v2264, %v2260
    %v2541 = vpack.c.b16 %v2269, %v2265
    %v2542 = vpack.c.b16 %v2270, %v2266
    %v2543 = vpack.c.b16 %v2271, %v2267
    %v2544 = vpack.c.b16 %v2272, %v2268
    %v2545 = vpack.c.b16 %v2277, %v2273
    %v2546 = vpack.c.b16 %v2278, %v2274
    %v2547 = vpack.c.b16 %v2279, %v2275
    %v2548 = vpack.c.b16 %v2280, %v2276
    %v2549 = vpack.c.b16 %v2285, %v2281
    %v2550 = vpack.c.b16 %v2286, %v2282
    %v2551 = vpack.c.b16 %v2287, %v2283
    %v2552 = vpack.c.b16 %v2288, %v2284
    %v2553 = vpack.c.b16 %v2293, %v2289
    %v2554 = vpack.c.b16 %v2294, %v2290
    %v2555 = vpack.c.b16 %v2295, %v2291
    %v2556 = vpack.c.b16 %v2296, %v2292
    %v2557 = vpack.c.b16 %v2301, %v2297
    %v2558 = vpack.c.b16 %v2302, %v2298
    %v2559 = vpack.c.b16 %v2303, %v2299
    %v2560 = vpack.c.b16 %v2304, %v2300
    %2817 = vmatprep.subr.bf16.mxu0 %v2306
    %2818 = vmatpush1.bf16.msra.mxu0 %v2305
    %2819 = vmatprep.subr.bf16.mxu0 %v2310
    %2820 = vmatpush1.bf16.msra.mxu0 %v2309
    %2821 = vmatprep.subr.bf16.mxu0 %v2314
    %2822 = vmatpush1.bf16.msra.mxu0 %v2313
    %2823 = vmatprep.subr.bf16.mxu0 %v2318
    %2824 = vmatpush1.bf16.msra.mxu0 %v2317
    %2825 = vmatprep.subr.bf16.mxu0 %v2322
    %2826 = vmatpush1.bf16.msra.mxu0 %v2321
    %2827 = vmatprep.subr.bf16.mxu0 %v2326
    %2828 = vmatpush1.bf16.msra.mxu0 %v2325
    %2829 = vmatprep.subr.bf16.mxu0 %v2330
    %2830 = vmatpush1.bf16.msra.mxu0 %v2329
    %2831 = vmatprep.subr.bf16.mxu0 %v2334
    %2832 = vmatpush1.bf16.msra.mxu0 %v2333
    %2833 = vmatprep.subr.bf16.mxu0 %v2338
    %2834 = vmatpush1.bf16.msra.mxu0 %v2337
    %2835 = vmatprep.subr.bf16.mxu0 %v2342
    %2836 = vmatpush1.bf16.msra.mxu0 %v2341
    %2837 = vmatprep.subr.bf16.mxu0 %v2346
    %2838 = vmatpush1.bf16.msra.mxu0 %v2345
    %2839 = vmatprep.subr.bf16.mxu0 %v2350
    %2840 = vmatpush1.bf16.msra.mxu0 %v2349
    %2841 = vmatprep.subr.bf16.mxu0 %v2354
    %2842 = vmatpush1.bf16.msra.mxu0 %v2353
    %2843 = vmatprep.subr.bf16.mxu0 %v2358
    %2844 = vmatpush1.bf16.msra.mxu0 %v2357
    %2845 = vmatprep.subr.bf16.mxu0 %v2362
    %2846 = vmatpush1.bf16.msra.mxu0 %v2361
    %2847 = vmatprep.subr.bf16.mxu0 %v2366
    %2848 = vmatpush1.bf16.msra.mxu0 %v2365
    %2849 = vmatprep.mubr.bf16.mxu0 %v1252
    %2850 = vmatmul.mubr.bf16.gmra.mrb[0].mxu0 %v1251
    %v2851 = vpop.f32.mrb[0].mxu0
    %v2852 = vadd.f32 %v1520, %v2851
    %v2853 = vpop.f32.mrb[0].mxu0
    %v2854 = vadd.f32 %v1524, %v2853
    %v2855 = vpop.f32.mrb[0].mxu0
    %v2856 = vpop.f32.mrb[0].mxu0
    %2857 = vdwg.mxu0
    %2858 = vmatprep.subr.bf16.mxu0 %v2370
    %2859 = vmatpush1.bf16.msra.mxu0 %v2369
    %2860 = vmatprep.subr.bf16.mxu0 %v2374
    %2861 = vmatpush1.bf16.msra.mxu0 %v2373
    %2862 = vmatprep.subr.bf16.mxu0 %v2378
    %2863 = vmatpush1.bf16.msra.mxu0 %v2377
    %2864 = vmatprep.subr.bf16.mxu0 %v2382
    %2865 = vmatpush1.bf16.msra.mxu0 %v2381
    %2866 = vmatprep.subr.bf16.mxu0 %v2386
    %2867 = vmatpush1.bf16.msra.mxu0 %v2385
    %2868 = vmatprep.subr.bf16.mxu0 %v2390
    %2869 = vmatpush1.bf16.msra.mxu0 %v2389
    %2870 = vmatprep.subr.bf16.mxu0 %v2394
    %2871 = vmatpush1.bf16.msra.mxu0 %v2393
    %2872 = vmatprep.subr.bf16.mxu0 %v2398
    %2873 = vmatpush1.bf16.msra.mxu0 %v2397
    %2874 = vmatprep.subr.bf16.mxu0 %v2402
    %2875 = vmatpush1.bf16.msra.mxu0 %v2401
    %2876 = vmatprep.subr.bf16.mxu0 %v2406
    %2877 = vmatpush1.bf16.msra.mxu0 %v2405
    %2878 = vmatprep.subr.bf16.mxu0 %v2410
    %2879 = vmatpush1.bf16.msra.mxu0 %v2409
    %2880 = vmatprep.subr.bf16.mxu0 %v2414
    %2881 = vmatpush1.bf16.msra.mxu0 %v2413
    %2882 = vmatprep.subr.bf16.mxu0 %v2418
    %2883 = vmatpush1.bf16.msra.mxu0 %v2417
    %2884 = vmatprep.subr.bf16.mxu0 %v2422
    %2885 = vmatpush1.bf16.msra.mxu0 %v2421
    %2886 = vmatprep.subr.bf16.mxu0 %v2426
    %2887 = vmatpush1.bf16.msra.mxu0 %v2425
    %2888 = vmatprep.subr.bf16.mxu0 %v2430
    %2889 = vmatpush1.bf16.msra.mxu0 %v2429
    %2890 = vmatprep.mubr.bf16.mxu0 %v1254
    %2891 = vmatmul.mubr.bf16.gmra.mrb[0].mxu0 %v1253
    %v2892 = vpop.f32.mrb[0].mxu0
    %v2893 = vadd.f32 %v2852, %v2892
    %v2894 = vpop.f32.mrb[0].mxu0
    %v2895 = vadd.f32 %v2854, %v2894
    %v2896 = vpop.f32.mrb[0].mxu0
    %v2897 = vpop.f32.mrb[0].mxu0
    %2898 = vdwg.mxu0
    %2899 = vmatprep.subr.bf16.mxu0 %v2434
    %2900 = vmatpush1.bf16.msra.mxu0 %v2433
    %2901 = vmatprep.subr.bf16.mxu0 %v2438
    %2902 = vmatpush1.bf16.msra.mxu0 %v2437
    %2903 = vmatprep.subr.bf16.mxu0 %v2442
    %2904 = vmatpush1.bf16.msra.mxu0 %v2441
    %2905 = vmatprep.subr.bf16.mxu0 %v2446
    %2906 = vmatpush1.bf16.msra.mxu0 %v2445
    %2907 = vmatprep.subr.bf16.mxu0 %v2450
    %2908 = vmatpush1.bf16.msra.mxu0 %v2449
    %2909 = vmatprep.subr.bf16.mxu0 %v2454
    %2910 = vmatpush1.bf16.msra.mxu0 %v2453
    %2911 = vmatprep.subr.bf16.mxu0 %v2458
    %2912 = vmatpush1.bf16.msra.mxu0 %v2457
    %2913 = vmatprep.subr.bf16.mxu0 %v2462
    %2914 = vmatpush1.bf16.msra.mxu0 %v2461
    %2915 = vmatprep.subr.bf16.mxu0 %v2466
    %2916 = vmatpush1.bf16.msra.mxu0 %v2465
    %2917 = vmatprep.subr.bf16.mxu0 %v2470
    %2918 = vmatpush1.bf16.msra.mxu0 %v2469
    %2919 = vmatprep.subr.bf16.mxu0 %v2474
    %2920 = vmatpush1.bf16.msra.mxu0 %v2473
    %2921 = vmatprep.subr.bf16.mxu0 %v2478
    %2922 = vmatpush1.bf16.msra.mxu0 %v2477
    %2923 = vmatprep.subr.bf16.mxu0 %v2482
    %2924 = vmatpush1.bf16.msra.mxu0 %v2481
    %2925 = vmatprep.subr.bf16.mxu0 %v2486
    %2926 = vmatpush1.bf16.msra.mxu0 %v2485
    %2927 = vmatprep.subr.bf16.mxu0 %v2490
    %2928 = vmatpush1.bf16.msra.mxu0 %v2489
    %2929 = vmatprep.subr.bf16.mxu0 %v2494
    %2930 = vmatpush1.bf16.msra.mxu0 %v2493
    %2931 = vmatprep.mubr.bf16.mxu0 %v1256
    %2932 = vmatmul.mubr.bf16.gmra.mrb[0].mxu0 %v1255
    %v2933 = vpop.f32.mrb[0].mxu0
    %v2934 = vadd.f32 %v2893, %v2933
    %v2935 = vpop.f32.mrb[0].mxu0
    %v2936 = vadd.f32 %v2895, %v2935
    %v2937 = vpop.f32.mrb[0].mxu0
    %v2938 = vpop.f32.mrb[0].mxu0
    %2939 = vdwg.mxu0
    %2940 = vmatprep.subr.bf16.mxu0 %v2498
    %2941 = vmatpush1.bf16.msra.mxu0 %v2497
    %2942 = vmatprep.subr.bf16.mxu0 %v2502
    %2943 = vmatpush1.bf16.msra.mxu0 %v2501
    %2944 = vmatprep.subr.bf16.mxu0 %v2506
    %2945 = vmatpush1.bf16.msra.mxu0 %v2505
    %2946 = vmatprep.subr.bf16.mxu0 %v2510
    %2947 = vmatpush1.bf16.msra.mxu0 %v2509
    %2948 = vmatprep.subr.bf16.mxu0 %v2514
    %2949 = vmatpush1.bf16.msra.mxu0 %v2513
    %2950 = vmatprep.subr.bf16.mxu0 %v2518
    %2951 = vmatpush1.bf16.msra.mxu0 %v2517
    %2952 = vmatprep.subr.bf16.mxu0 %v2522
    %2953 = vmatpush1.bf16.msra.mxu0 %v2521
    %2954 = vmatprep.subr.bf16.mxu0 %v2526
    %2955 = vmatpush1.bf16.msra.mxu0 %v2525
    %2956 = vmatprep.subr.bf16.mxu0 %v2530
    %2957 = vmatpush1.bf16.msra.mxu0 %v2529
    %2958 = vmatprep.subr.bf16.mxu0 %v2534
    %2959 = vmatpush1.bf16.msra.mxu0 %v2533
    %2960 = vmatprep.subr.bf16.mxu0 %v2538
    %2961 = vmatpush1.bf16.msra.mxu0 %v2537
    %2962 = vmatprep.subr.bf16.mxu0 %v2542
    %2963 = vmatpush1.bf16.msra.mxu0 %v2541
    %2964 = vmatprep.subr.bf16.mxu0 %v2546
    %2965 = vmatpush1.bf16.msra.mxu0 %v2545
    %2966 = vmatprep.subr.bf16.mxu0 %v2550
    %2967 = vmatpush1.bf16.msra.mxu0 %v2549
    %2968 = vmatprep.subr.bf16.mxu0 %v2554
    %2969 = vmatpush1.bf16.msra.mxu0 %v2553
    %2970 = vmatprep.subr.bf16.mxu0 %v2558
    %2971 = vmatpush1.bf16.msra.mxu0 %v2557
    %2972 = vmatprep.mubr.bf16.mxu0 %v1258
    %2973 = vmatmul.mubr.bf16.gmra.mrb[0].mxu0 %v1257
    %v2974 = vpop.f32.mrb[0].mxu0
    %v2975 = vadd.f32 %v2934, %v2974
    %v2976 = vpop.f32.mrb[0].mxu0
    %v2977 = vadd.f32 %v2936, %v2976
    %v2978 = vpop.f32.mrb[0].mxu0
    %v2979 = vpop.f32.mrb[0].mxu0
    %2980 = vdwg.mxu0
    %2981 = vmatprep.subr.bf16.mxu0 %v2308
    %2982 = vmatpush1.bf16.msra.mxu0 %v2307
    %2983 = vmatprep.subr.bf16.mxu0 %v2312
    %2984 = vmatpush1.bf16.msra.mxu0 %v2311
    %2985 = vmatprep.subr.bf16.mxu0 %v2316
    %2986 = vmatpush1.bf16.msra.mxu0 %v2315
    %2987 = vmatprep.subr.bf16.mxu0 %v2320
    %2988 = vmatpush1.bf16.msra.mxu0 %v2319
    %2989 = vmatprep.subr.bf16.mxu0 %v2324
    %2990 = vmatpush1.bf16.msra.mxu0 %v2323
    %2991 = vmatprep.subr.bf16.mxu0 %v2328
    %2992 = vmatpush1.bf16.msra.mxu0 %v2327
    %2993 = vmatprep.subr.bf16.mxu0 %v2332
    %2994 = vmatpush1.bf16.msra.mxu0 %v2331
    %2995 = vmatprep.subr.bf16.mxu0 %v2336
    %2996 = vmatpush1.bf16.msra.mxu0 %v2335
    %2997 = vmatprep.subr.bf16.mxu0 %v2340
    %2998 = vmatpush1.bf16.msra.mxu0 %v2339
    %2999 = vmatprep.subr.bf16.mxu0 %v2344
    %3000 = vmatpush1.bf16.msra.mxu0 %v2343
    %3001 = vmatprep.subr.bf16.mxu0 %v2348
    %3002 = vmatpush1.bf16.msra.mxu0 %v2347
    %3003 = vmatprep.subr.bf16.mxu0 %v2352
    %3004 = vmatpush1.bf16.msra.mxu0 %v2351
    %3005 = vmatprep.subr.bf16.mxu0 %v2356
    %3006 = vmatpush1.bf16.msra.mxu0 %v2355
    %3007 = vmatprep.subr.bf16.mxu0 %v2360
    %3008 = vmatpush1.bf16.msra.mxu0 %v2359
    %3009 = vmatprep.subr.bf16.mxu0 %v2364
    %3010 = vmatpush1.bf16.msra.mxu0 %v2363
    %3011 = vmatprep.subr.bf16.mxu0 %v2368
    %3012 = vmatpush1.bf16.msra.mxu0 %v2367
    %3013 = vmatprep.mubr.bf16.mxu0 %v1252
    %3014 = vmatmul.mubr.bf16.gmra.mrb[0].mxu0 %v1251
    %v3015 = vpop.f32.mrb[0].mxu0
    %v3016 = vadd.f32 %v1528, %v3015
    %v3017 = vpop.f32.mrb[0].mxu0
    %v3018 = vadd.f32 %v1532, %v3017
    %v3019 = vpop.f32.mrb[0].mxu0
    %v3020 = vpop.f32.mrb[0].mxu0
    %3021 = vdwg.mxu0
    %3022 = vmatprep.subr.bf16.mxu0 %v2372
    %3023 = vmatpush1.bf16.msra.mxu0 %v2371
    %3024 = vmatprep.subr.bf16.mxu0 %v2376
    %3025 = vmatpush1.bf16.msra.mxu0 %v2375
    %3026 = vmatprep.subr.bf16.mxu0 %v2380
    %3027 = vmatpush1.bf16.msra.mxu0 %v2379
    %3028 = vmatprep.subr.bf16.mxu0 %v2384
    %3029 = vmatpush1.bf16.msra.mxu0 %v2383
    %3030 = vmatprep.subr.bf16.mxu0 %v2388
    %3031 = vmatpush1.bf16.msra.mxu0 %v2387
    %3032 = vmatprep.subr.bf16.mxu0 %v2392
    %3033 = vmatpush1.bf16.msra.mxu0 %v2391
    %3034 = vmatprep.subr.bf16.mxu0 %v2396
    %3035 = vmatpush1.bf16.msra.mxu0 %v2395
    %3036 = vmatprep.subr.bf16.mxu0 %v2400
    %3037 = vmatpush1.bf16.msra.mxu0 %v2399
    %3038 = vmatprep.subr.bf16.mxu0 %v2404
    %3039 = vmatpush1.bf16.msra.mxu0 %v2403
    %3040 = vmatprep.subr.bf16.mxu0 %v2408
    %3041 = vmatpush1.bf16.msra.mxu0 %v2407
    %3042 = vmatprep.subr.bf16.mxu0 %v2412
    %3043 = vmatpush1.bf16.msra.mxu0 %v2411
    %3044 = vmatprep.subr.bf16.mxu0 %v2416
    %3045 = vmatpush1.bf16.msra.mxu0 %v2415
    %3046 = vmatprep.subr.bf16.mxu0 %v2420
    %3047 = vmatpush1.bf16.msra.mxu0 %v2419
    %3048 = vmatprep.subr.bf16.mxu0 %v2424
    %3049 = vmatpush1.bf16.msra.mxu0 %v2423
    %3050 = vmatprep.subr.bf16.mxu0 %v2428
    %3051 = vmatpush1.bf16.msra.mxu0 %v2427
    %3052 = vmatprep.subr.bf16.mxu0 %v2432
    %3053 = vmatpush1.bf16.msra.mxu0 %v2431
    %3054 = vmatprep.mubr.bf16.mxu0 %v1254
    %3055 = vmatmul.mubr.bf16.gmra.mrb[0].mxu0 %v1253
    %v3056 = vpop.f32.mrb[0].mxu0
    %v3057 = vadd.f32 %v3016, %v3056
    %v3058 = vpop.f32.mrb[0].mxu0
    %v3059 = vadd.f32 %v3018, %v3058
    %v3060 = vpop.f32.mrb[0].mxu0
    %v3061 = vpop.f32.mrb[0].mxu0
    %3062 = vdwg.mxu0
    %3063 = vmatprep.subr.bf16.mxu0 %v2436
    %3064 = vmatpush1.bf16.msra.mxu0 %v2435
    %3065 = vmatprep.subr.bf16.mxu0 %v2440
    %3066 = vmatpush1.bf16.msra.mxu0 %v2439
    %3067 = vmatprep.subr.bf16.mxu0 %v2444
    %3068 = vmatpush1.bf16.msra.mxu0 %v2443
    %3069 = vmatprep.subr.bf16.mxu0 %v2448
    %3070 = vmatpush1.bf16.msra.mxu0 %v2447
    %3071 = vmatprep.subr.bf16.mxu0 %v2452
    %3072 = vmatpush1.bf16.msra.mxu0 %v2451
    %3073 = vmatprep.subr.bf16.mxu0 %v2456
    %3074 = vmatpush1.bf16.msra.mxu0 %v2455
    %3075 = vmatprep.subr.bf16.mxu0 %v2460
    %3076 = vmatpush1.bf16.msra.mxu0 %v2459
    %3077 = vmatprep.subr.bf16.mxu0 %v2464
    %3078 = vmatpush1.bf16.msra.mxu0 %v2463
    %3079 = vmatprep.subr.bf16.mxu0 %v2468
    %3080 = vmatpush1.bf16.msra.mxu0 %v2467
    %3081 = vmatprep.subr.bf16.mxu0 %v2472
    %3082 = vmatpush1.bf16.msra.mxu0 %v2471
    %3083 = vmatprep.subr.bf16.mxu0 %v2476
    %3084 = vmatpush1.bf16.msra.mxu0 %v2475
    %3085 = vmatprep.subr.bf16.mxu0 %v2480
    %3086 = vmatpush1.bf16.msra.mxu0 %v2479
    %3087 = vmatprep.subr.bf16.mxu0 %v2484
    %3088 = vmatpush1.bf16.msra.mxu0 %v2483
    %3089 = vmatprep.subr.bf16.mxu0 %v2488
    %3090 = vmatpush1.bf16.msra.mxu0 %v2487
    %3091 = vmatprep.subr.bf16.mxu0 %v2492
    %3092 = vmatpush1.bf16.msra.mxu0 %v2491
    %3093 = vmatprep.subr.bf16.mxu0 %v2496
    %3094 = vmatpush1.bf16.msra.mxu0 %v2495
    %3095 = vmatprep.mubr.bf16.mxu0 %v1256
    %3096 = vmatmul.mubr.bf16.gmra.mrb[0].mxu0 %v1255
    %v3097 = vpop.f32.mrb[0].mxu0
    %v3098 = vadd.f32 %v3057, %v3097
    %v3099 = vpop.f32.mrb[0].mxu0
    %v3100 = vadd.f32 %v3059, %v3099
    %v3101 = vpop.f32.mrb[0].mxu0
    %v3102 = vpop.f32.mrb[0].mxu0
    %3103 = vdwg.mxu0
    %3104 = vmatprep.subr.bf16.mxu0 %v2500
    %3105 = vmatpush1.bf16.msra.mxu0 %v2499
    %3106 = vmatprep.subr.bf16.mxu0 %v2504
    %3107 = vmatpush1.bf16.msra.mxu0 %v2503
    %3108 = vmatprep.subr.bf16.mxu0 %v2508
    %3109 = vmatpush1.bf16.msra.mxu0 %v2507
    %3110 = vmatprep.subr.bf16.mxu0 %v2512
    %3111 = vmatpush1.bf16.msra.mxu0 %v2511
    %3112 = vmatprep.subr.bf16.mxu0 %v2516
    %3113 = vmatpush1.bf16.msra.mxu0 %v2515
    %3114 = vmatprep.subr.bf16.mxu0 %v2520
    %3115 = vmatpush1.bf16.msra.mxu0 %v2519
    %3116 = vmatprep.subr.bf16.mxu0 %v2524
    %3117 = vmatpush1.bf16.msra.mxu0 %v2523
    %3118 = vmatprep.subr.bf16.mxu0 %v2528
    %3119 = vmatpush1.bf16.msra.mxu0 %v2527
    %3120 = vmatprep.subr.bf16.mxu0 %v2532
    %3121 = vmatpush1.bf16.msra.mxu0 %v2531
    %3122 = vmatprep.subr.bf16.mxu0 %v2536
    %3123 = vmatpush1.bf16.msra.mxu0 %v2535
    %3124 = vmatprep.subr.bf16.mxu0 %v2540
    %3125 = vmatpush1.bf16.msra.mxu0 %v2539
    %3126 = vmatprep.subr.bf16.mxu0 %v2544
    %3127 = vmatpush1.bf16.msra.mxu0 %v2543
    %3128 = vmatprep.subr.bf16.mxu0 %v2548
    %3129 = vmatpush1.bf16.msra.mxu0 %v2547
    %3130 = vmatprep.subr.bf16.mxu0 %v2552
    %3131 = vmatpush1.bf16.msra.mxu0 %v2551
    %3132 = vmatprep.subr.bf16.mxu0 %v2556
    %3133 = vmatpush1.bf16.msra.mxu0 %v2555
    %3134 = vmatprep.subr.bf16.mxu0 %v2560
    %3135 = vmatpush1.bf16.msra.mxu0 %v2559
    %3136 = vmatprep.mubr.bf16.mxu0 %v1258
    %3137 = vmatmul.mubr.bf16.gmra.mrb[0].mxu0 %v1257
    %v3138 = vpop.f32.mrb[0].mxu0
    %v3139 = vadd.f32 %v3098, %v3138
    %v3140 = vpop.f32.mrb[0].mxu0
    %v3141 = vadd.f32 %v3100, %v3140
    %v3142 = vpop.f32.mrb[0].mxu0
    %v3143 = vpop.f32.mrb[0].mxu0
    %3144 = vdwg.mxu0
    %v3145 = vmax.f32 %v2975, 0.0
    %v3146 = vmax.f32 %v2977, 0.0
    %v3147 = vmax.f32 %v3139, 0.0
    %v3148 = vmax.f32 %v3141, 0.0
    %v3149 = vpack.c.bf16 %v3145, %v3145
    %v3150 = vpack.c.bf16 %v3146, %v3146
    %v3151 = vpack.c.bf16 %v3147, %v3147
    %v3152 = vpack.c.bf16 %v3148, %v3148
    %v3153 = vld [vmem:[#allocation10] sm:$0xf]
    %v3154 = vld [vmem:[#allocation10 + $0x4] sm:$0xf]
    %v3155 = vld [vmem:[#allocation10 + $0x8] sm:$0xf]
    %v3156 = vld [vmem:[#allocation10 + $0xc] sm:$0xf]
    %v3157 = vld [vmem:[#allocation10 + $0x10] sm:$0xf]
    %v3158 = vld [vmem:[#allocation10 + $0x14] sm:$0xf]
    %v3159 = vld [vmem:[#allocation10 + $0x18] sm:$0xf]
    %v3160 = vld [vmem:[#allocation10 + $0x1c] sm:$0xf]
    %v3161 = vld [vmem:[#allocation10 + $0x20] sm:$0xf]
    %v3162 = vld [vmem:[#allocation10 + $0x24] sm:$0xf]
    %v3163 = vld [vmem:[#allocation10 + $0x28] sm:$0xf]
    %v3164 = vld [vmem:[#allocation10 + $0x2c] sm:$0xf]
    %v3165 = vld [vmem:[#allocation10 + $0x30] sm:$0xf]
    %v3166 = vld [vmem:[#allocation10 + $0x34] sm:$0xf]
    %v3167 = vld [vmem:[#allocation10 + $0x38] sm:$0xf]
    %v3168 = vld [vmem:[#allocation10 + $0x3c] sm:$0xf]
    %v3169 = vld [vmem:[#allocation10 + $0x40] sm:$0xf]
    %v3170 = vld [vmem:[#allocation10 + $0x44] sm:$0xf]
    %v3171 = vld [vmem:[#allocation10 + $0x48] sm:$0xf]
    %v3172 = vld [vmem:[#allocation10 + $0x4c] sm:$0xf]
    %v3173 = vld [vmem:[#allocation10 + $0x50] sm:$0xf]
    %v3174 = vld [vmem:[#allocation10 + $0x54] sm:$0xf]
    %v3175 = vld [vmem:[#allocation10 + $0x58] sm:$0xf]
    %v3176 = vld [vmem:[#allocation10 + $0x5c] sm:$0xf]
    %v3177 = vld [vmem:[#allocation10 + $0x60] sm:$0xf]
    %v3178 = vld [vmem:[#allocation10 + $0x64] sm:$0xf]
    %v3179 = vld [vmem:[#allocation10 + $0x68] sm:$0xf]
    %v3180 = vld [vmem:[#allocation10 + $0x6c] sm:$0xf]
    %v3181 = vld [vmem:[#allocation10 + $0x70] sm:$0xf]
    %v3182 = vld [vmem:[#allocation10 + $0x74] sm:$0xf]
    %v3183 = vld [vmem:[#allocation10 + $0x78] sm:$0xf]
    %v3184 = vld [vmem:[#allocation10 + $0x7c] sm:$0xf]
    %v3185 = vld [vmem:[#allocation10 + $0x80] sm:$0xf]
    %v3186 = vld [vmem:[#allocation10 + $0x84] sm:$0xf]
    %v3187 = vld [vmem:[#allocation10 + $0x88] sm:$0xf]
    %v3188 = vld [vmem:[#allocation10 + $0x8c] sm:$0xf]
    %v3189 = vld [vmem:[#allocation10 + $0x90] sm:$0xf]
    %v3190 = vld [vmem:[#allocation10 + $0x94] sm:$0xf]
    %v3191 = vld [vmem:[#allocation10 + $0x98] sm:$0xf]
    %v3192 = vld [vmem:[#allocation10 + $0x9c] sm:$0xf]
    %v3193 = vld [vmem:[#allocation10 + $0xa0] sm:$0xf]
    %v3194 = vld [vmem:[#allocation10 + $0xa4] sm:$0xf]
    %v3195 = vld [vmem:[#allocation10 + $0xa8] sm:$0xf]
    %v3196 = vld [vmem:[#allocation10 + $0xac] sm:$0xf]
    %v3197 = vld [vmem:[#allocation10 + $0xb0] sm:$0xf]
    %v3198 = vld [vmem:[#allocation10 + $0xb4] sm:$0xf]
    %v3199 = vld [vmem:[#allocation10 + $0xb8] sm:$0xf]
    %v3200 = vld [vmem:[#allocation10 + $0xbc] sm:$0xf]
    %v3201 = vld [vmem:[#allocation10 + $0xc0] sm:$0xf]
    %v3202 = vld [vmem:[#allocation10 + $0xc4] sm:$0xf]
    %v3203 = vld [vmem:[#allocation10 + $0xc8] sm:$0xf]
    %v3204 = vld [vmem:[#allocation10 + $0xcc] sm:$0xf]
    %v3205 = vld [vmem:[#allocation10 + $0xd0] sm:$0xf]
    %v3206 = vld [vmem:[#allocation10 + $0xd4] sm:$0xf]
    %v3207 = vld [vmem:[#allocation10 + $0xd8] sm:$0xf]
    %v3208 = vld [vmem:[#allocation10 + $0xdc] sm:$0xf]
    %v3209 = vld [vmem:[#allocation10 + $0xe0] sm:$0xf]
    %v3210 = vld [vmem:[#allocation10 + $0xe4] sm:$0xf]
    %v3211 = vld [vmem:[#allocation10 + $0xe8] sm:$0xf]
    %v3212 = vld [vmem:[#allocation10 + $0xec] sm:$0xf]
    %v3213 = vld [vmem:[#allocation10 + $0xf0] sm:$0xf]
    %v3214 = vld [vmem:[#allocation10 + $0xf4] sm:$0xf]
    %v3215 = vld [vmem:[#allocation10 + $0xf8] sm:$0xf]
    %v3216 = vld [vmem:[#allocation10 + $0xfc] sm:$0xf]
    %v3217 = vld [vmem:[%s7] sm:$0x1]
    %v3219 = vlaneseq
    %v3220 = vshrl.u32 %v3219, 7
    %v3221 = vsub.s32 0, %v3220
    %v3222 = vrot.slane %v3217, %v3221
    %v3288 = vunpack.c.l.b16 %v3153
    %v3289 = vunpack.c.l.b16 %v3154
    %v3290 = vunpack.c.l.b16 %v3155
    %v3291 = vunpack.c.l.b16 %v3156
    %v3292 = vunpack.c.l.b16 %v3157
    %v3293 = vunpack.c.l.b16 %v3158
    %v3294 = vunpack.c.l.b16 %v3159
    %v3295 = vunpack.c.l.b16 %v3160
    %v3296 = vunpack.c.l.b16 %v3161
    %v3297 = vunpack.c.l.b16 %v3162
    %v3298 = vunpack.c.l.b16 %v3163
    %v3299 = vunpack.c.l.b16 %v3164
    %v3300 = vunpack.c.l.b16 %v3165
    %v3301 = vunpack.c.l.b16 %v3166
    %v3302 = vunpack.c.l.b16 %v3167
    %v3303 = vunpack.c.l.b16 %v3168
    %v3304 = vunpack.c.l.b16 %v3169
    %v3305 = vunpack.c.l.b16 %v3170
    %v3306 = vunpack.c.l.b16 %v3171
    %v3307 = vunpack.c.l.b16 %v3172
    %v3308 = vunpack.c.l.b16 %v3173
    %v3309 = vunpack.c.l.b16 %v3174
    %v3310 = vunpack.c.l.b16 %v3175
    %v3311 = vunpack.c.l.b16 %v3176
    %v3312 = vunpack.c.l.b16 %v3177
    %v3313 = vunpack.c.l.b16 %v3178
    %v3314 = vunpack.c.l.b16 %v3179
    %v3315 = vunpack.c.l.b16 %v3180
    %v3316 = vunpack.c.l.b16 %v3181
    %v3317 = vunpack.c.l.b16 %v3182
    %v3318 = vunpack.c.l.b16 %v3183
    %v3319 = vunpack.c.l.b16 %v3184
    %v3320 = vunpack.c.l.b16 %v3185
    %v3321 = vunpack.c.l.b16 %v3186
    %v3322 = vunpack.c.l.b16 %v3187
    %v3323 = vunpack.c.l.b16 %v3188
    %v3324 = vunpack.c.l.b16 %v3189
    %v3325 = vunpack.c.l.b16 %v3190
    %v3326 = vunpack.c.l.b16 %v3191
    %v3327 = vunpack.c.l.b16 %v3192
    %v3328 = vunpack.c.l.b16 %v3193
    %v3329 = vunpack.c.l.b16 %v3194
    %v3330 = vunpack.c.l.b16 %v3195
    %v3331 = vunpack.c.l.b16 %v3196
    %v3332 = vunpack.c.l.b16 %v3197
    %v3333 = vunpack.c.l.b16 %v3198
    %v3334 = vunpack.c.l.b16 %v3199
    %v3335 = vunpack.c.l.b16 %v3200
    %v3336 = vunpack.c.l.b16 %v3201
    %v3337 = vunpack.c.l.b16 %v3202
    %v3338 = vunpack.c.l.b16 %v3203
    %v3339 = vunpack.c.l.b16 %v3204
    %v3340 = vunpack.c.l.b16 %v3205
    %v3341 = vunpack.c.l.b16 %v3206
    %v3342 = vunpack.c.l.b16 %v3207
    %v3343 = vunpack.c.l.b16 %v3208
    %v3344 = vunpack.c.l.b16 %v3209
    %v3345 = vunpack.c.l.b16 %v3210
    %v3346 = vunpack.c.l.b16 %v3211
    %v3347 = vunpack.c.l.b16 %v3212
    %v3348 = vunpack.c.l.b16 %v3213
    %v3349 = vunpack.c.l.b16 %v3214
    %v3350 = vunpack.c.l.b16 %v3215
    %v3351 = vunpack.c.l.b16 %v3216
    %v3352 = vpack.c.b16 %v3289, %v3288
    %v3353 = vpack.c.b16 %v3291, %v3290
    %v3354 = vpack.c.b16 %v3293, %v3292
    %v3355 = vpack.c.b16 %v3295, %v3294
    %v3356 = vpack.c.b16 %v3297, %v3296
    %v3357 = vpack.c.b16 %v3299, %v3298
    %v3358 = vpack.c.b16 %v3301, %v3300
    %v3359 = vpack.c.b16 %v3303, %v3302
    %v3360 = vpack.c.b16 %v3305, %v3304
    %v3361 = vpack.c.b16 %v3307, %v3306
    %v3362 = vpack.c.b16 %v3309, %v3308
    %v3363 = vpack.c.b16 %v3311, %v3310
    %v3364 = vpack.c.b16 %v3313, %v3312
    %v3365 = vpack.c.b16 %v3315, %v3314
    %v3366 = vpack.c.b16 %v3317, %v3316
    %v3367 = vpack.c.b16 %v3319, %v3318
    %v3368 = vpack.c.b16 %v3321, %v3320
    %v3369 = vpack.c.b16 %v3323, %v3322
    %v3370 = vpack.c.b16 %v3325, %v3324
    %v3371 = vpack.c.b16 %v3327, %v3326
    %v3372 = vpack.c.b16 %v3329, %v3328
    %v3373 = vpack.c.b16 %v3331, %v3330
    %v3374 = vpack.c.b16 %v3333, %v3332
    %v3375 = vpack.c.b16 %v3335, %v3334
    %v3376 = vpack.c.b16 %v3337, %v3336
    %v3377 = vpack.c.b16 %v3339, %v3338
    %v3378 = vpack.c.b16 %v3341, %v3340
    %v3379 = vpack.c.b16 %v3343, %v3342
    %v3380 = vpack.c.b16 %v3345, %v3344
    %v3381 = vpack.c.b16 %v3347, %v3346
    %v3382 = vpack.c.b16 %v3349, %v3348
    %v3383 = vpack.c.b16 %v3351, %v3350
    %3416 = vmatprep.subr.bf16.mxu0 0
    %3417 = vmatpush1.bf16.msra.mxu0 %v3352
    %3418 = vmatprep.subr.bf16.mxu0 0
    %3419 = vmatpush1.bf16.msra.mxu0 %v3353
    %3420 = vmatprep.subr.bf16.mxu0 0
    %3421 = vmatpush1.bf16.msra.mxu0 %v3354
    %3422 = vmatprep.subr.bf16.mxu0 0
    %3423 = vmatpush1.bf16.msra.mxu0 %v3355
    %3424 = vmatprep.subr.bf16.mxu0 0
    %3425 = vmatpush1.bf16.msra.mxu0 %v3356
    %3426 = vmatprep.subr.bf16.mxu0 0
    %3427 = vmatpush1.bf16.msra.mxu0 %v3357
    %3428 = vmatprep.subr.bf16.mxu0 0
    %3429 = vmatpush1.bf16.msra.mxu0 %v3358
    %3430 = vmatprep.subr.bf16.mxu0 0
    %3431 = vmatpush1.bf16.msra.mxu0 %v3359
    %3432 = vmatprep.subr.bf16.mxu0 0
    %3433 = vmatpush1.bf16.msra.mxu0 %v3360
    %3434 = vmatprep.subr.bf16.mxu0 0
    %3435 = vmatpush1.bf16.msra.mxu0 %v3361
    %3436 = vmatprep.subr.bf16.mxu0 0
    %3437 = vmatpush1.bf16.msra.mxu0 %v3362
    %3438 = vmatprep.subr.bf16.mxu0 0
    %3439 = vmatpush1.bf16.msra.mxu0 %v3363
    %3440 = vmatprep.subr.bf16.mxu0 0
    %3441 = vmatpush1.bf16.msra.mxu0 %v3364
    %3442 = vmatprep.subr.bf16.mxu0 0
    %3443 = vmatpush1.bf16.msra.mxu0 %v3365
    %3444 = vmatprep.subr.bf16.mxu0 0
    %3445 = vmatpush1.bf16.msra.mxu0 %v3366
    %3446 = vmatprep.subr.bf16.mxu0 0
    %3447 = vmatpush1.bf16.msra.mxu0 %v3367
    %3448 = vmatprep.mubr.bf16.mxu0 %v3150
    %3449 = vmatmul.mubr.bf16.gmra.mrb[0].mxu0 %v3149
    %v3450 = vpop.f32.mrb[0].mxu0
    %v3451 = vadd.f32 %v3222, %v3450
    %v3452 = vpop.f32.mrb[0].mxu0
    %v3453 = vpop.f32.mrb[0].mxu0
    %v3454 = vpop.f32.mrb[0].mxu0
    %3455 = vdwg.mxu0
    %3456 = vmatprep.subr.bf16.mxu0 0
    %3457 = vmatpush1.bf16.msra.mxu0 %v3368
    %3458 = vmatprep.subr.bf16.mxu0 0
    %3459 = vmatpush1.bf16.msra.mxu0 %v3369
    %3460 = vmatprep.subr.bf16.mxu0 0
    %3461 = vmatpush1.bf16.msra.mxu0 %v3370
    %3462 = vmatprep.subr.bf16.mxu0 0
    %3463 = vmatpush1.bf16.msra.mxu0 %v3371
    %3464 = vmatprep.subr.bf16.mxu0 0
    %3465 = vmatpush1.bf16.msra.mxu0 %v3372
    %3466 = vmatprep.subr.bf16.mxu0 0
    %3467 = vmatpush1.bf16.msra.mxu0 %v3373
    %3468 = vmatprep.subr.bf16.mxu0 0
    %3469 = vmatpush1.bf16.msra.mxu0 %v3374
    %3470 = vmatprep.subr.bf16.mxu0 0
    %3471 = vmatpush1.bf16.msra.mxu0 %v3375
    %3472 = vmatprep.subr.bf16.mxu0 0
    %3473 = vmatpush1.bf16.msra.mxu0 %v3376
    %3474 = vmatprep.subr.bf16.mxu0 0
    %3475 = vmatpush1.bf16.msra.mxu0 %v3377
    %3476 = vmatprep.subr.bf16.mxu0 0
    %3477 = vmatpush1.bf16.msra.mxu0 %v3378
    %3478 = vmatprep.subr.bf16.mxu0 0
    %3479 = vmatpush1.bf16.msra.mxu0 %v3379
    %3480 = vmatprep.subr.bf16.mxu0 0
    %3481 = vmatpush1.bf16.msra.mxu0 %v3380
    %3482 = vmatprep.subr.bf16.mxu0 0
    %3483 = vmatpush1.bf16.msra.mxu0 %v3381
    %3484 = vmatprep.subr.bf16.mxu0 0
    %3485 = vmatpush1.bf16.msra.mxu0 %v3382
    %3486 = vmatprep.subr.bf16.mxu0 0
    %3487 = vmatpush1.bf16.msra.mxu0 %v3383
    %3488 = vmatprep.mubr.bf16.mxu0 %v3152
    %3489 = vmatmul.mubr.bf16.gmra.mrb[0].mxu0 %v3151
    %v3490 = vpop.f32.mrb[0].mxu0
    %v3491 = vadd.f32 %v3451, %v3490
    %v3492 = vpop.f32.mrb[0].mxu0
    %v3493 = vpop.f32.mrb[0].mxu0
    %v3494 = vpop.f32.mrb[0].mxu0
    %3495 = vdwg.mxu0
    %3496 = vst [vmem:[#allocation11] sm:$0xff] %v3491
    // Predicated region
    $region54: #{tpu_custom_call.1} parent=1 // pred_check
      _
    $region55: #{tpu_custom_call.1} parent=1 // pred_check_branch
      %3498 = sbr.rel (0) target = $region57
    $region56: #{tpu_custom_call.1} parent=1 // pred_region
      %s3500 = ssub.s32 128, 128
      %3501 = vsyncadd [#allocation4], %s3500
      %s3503 = sshll.u32 [#allocation11], 4
      %s3504 = int_to_ptr.vmem [resolvable:$true] %s3503
      %3506 = dma.vmem_to_hbm [thread:$0]  %s3504, 128, %s8, [#allocation4]
    $region57: #{tpu_custom_call.1} parent=1 // pred_fallthru
      _
    // Predicated region
    $region58: #{tpu_custom_call.1} parent=1 // pred_check
      _
    $region59: #{tpu_custom_call.1} parent=1 // pred_check_branch
      %3508 = sbr.rel (0) target = $region61
    $region60: #{tpu_custom_call.1} parent=1 // pred_region
      %3509 = dma.done [#allocation4], 128
    $region61: #{tpu_custom_call.1} parent=1 // pred_fallthru
      _
    %3510 = vsyncpa [#allocation3], 1
    %3511 = vsyncpa [#allocation6], 1
    %3512 = vsyncpa [#allocation9], 1
    %3513 = vsyncpa [#allocation4], 1

</llo_original>
